<compile_context>
chip_gen: v7x
topology: tpu7x:2x2x1
jax: 0.10.0
libtpu: 0.0.40
codegen_flags: <defaults>
</compile_context>

<pallas_src>
import functools

import jax
import jax.numpy as jnp
from jax.experimental import pallas as pl
from jax.experimental.pallas import tpu as pltpu


def _round_up(n, m):
    return ((n + m - 1) // m) * m


def _split_spatial_kernel(wcol_ref, wmat_ref, bias_ref, x_ref, o_ref, stack_ref,
                          *, cards, wt, lt, cbp):
    """One spatial row band: cards x (dilated depthwise 3x3) + 1x1 fusion conv.

    wcol_ref : VMEM (cards*9, CBpad, 1)   per-sublane depthwise tap weights
    wmat_ref : VMEM (CoBpad, cards*CBpad) batch-block-diagonal 1x1 fusion matrix
    bias_ref : VMEM (CoBpad, 1)           fusion bias per output sublane
    x_ref    : VMEM (1, CBpad, Lt)        band input: (c,b) on sublanes,
                                          flattened padded spatial on lanes
    o_ref    : VMEM (1, CoBpad, Lt)       band output (same layout)
    stack_ref: VMEM (cards*CBpad, Lt)     scratch: depthwise planes, card-major
    """
    x = x_ref[0]                                            # (CBpad, Lt) lane-dense load

    # ---- depthwise dilated 3x3 convs: one pltpu.roll (XLU) per tap ---------
    for d_idx in range(cards):
        d = d_idx + 1
        acc = x * wcol_ref[d_idx * 9 + 4]                   # center tap (shift 0)
        for ki in range(3):
            for kj in range(3):
                if ki == 1 and kj == 1:
                    continue
                delta = (ki - 1) * d * wt + (kj - 1) * d    # tap offset in flat plane
                shift = (-delta) % lt                       # rolled[p] == x[p + delta]
                tap = pltpu.roll(x, shift, axis=1)
                acc = acc + tap * wcol_ref[d_idx * 9 + ki * 3 + kj]
        stack_ref[pl.ds(d_idx * cbp, cbp), :] = acc         # bounded vreg live-range

    # ---- 1x1 fusion conv on the MXU (cross-sublane channel mixing) ---------
    fused = jnp.dot(wmat_ref[...], stack_ref[...],
                    preferred_element_type=jnp.float32)     # (CoBpad, Lt)
    o_ref[0] = fused + bias_ref[...]                        # lane-dense store


def split_spatial_conv(x, dw_weights, fusion_w, fusion_b, *, cards):
    """SplitSpatialConv forward.

    x          : (B, C, H, W) float32                  (NCHW, like PyTorch)
    dw_weights : (cards, C, 3, 3)  depthwise conv weights (torch (C,1,3,3) squeezed)
    fusion_w   : (C, C*cards)      fusion 1x1 conv weight (torch (C, C*cards, 1, 1))
    fusion_b   : (C,)              fusion bias
    returns    : (B, C, H, W) float32
    """
    B, C, H, W = x.shape
    f32 = jnp.float32
    P = cards                                   # max dilation == halo rows/cols
    Wp = W + 2 * P
    CB = C * B
    CBpad = _round_up(CB, 8)                    # sublanes: (channel, batch) pairs
    CoBpad = CBpad                              # fusion keeps C output channels

    # ---- choose the row-band count T (parallel grid steps) -----------------
    # Prefer >=2 bands (v7x megacore + real pipelining) with the largest band
    # that keeps double-buffered in/out blocks + scratch under a per-step
    # VMEM budget safe on every generation (v5e 16 MiB default scoped limit,
    # v7x 64 MiB physical).
    divisors = [t for t in range(1, H + 1) if H % t == 0]
    budget = 12 << 20
    T = None
    for t in divisors:
        if t == 1 and len(divisors) > 1:
            continue                            # want >= 2 parallel steps
        hb = H // t
        lt = _round_up((hb + 2 * P) * Wp, 128)
        need = 4 * lt * (2 * (CBpad + CoBpad) + cards * CBpad)
        if need <= budget:
            T = t
            break
    if T is None:
        T = divisors[-1]
    Hb = H // T
    Hb2 = Hb + 2 * P                            # band rows incl. dilation halo
    Lb = Hb2 * Wp                               # flattened band plane length
    Lt = _round_up(Lb, 128)                     # lane-dense (multiple of 128)

    # ---- pack input: (c,b) on sublanes, flattened padded band on lanes -----
    xp = jnp.pad(x.astype(f32), ((0, 0), (0, 0), (P, P), (P, P)))   # (B,C,Hp,Wp)
    xp = jnp.transpose(xp, (1, 0, 2, 3))                            # (C,B,Hp,Wp)
    bands = jnp.stack([xp[:, :, t * Hb:t * Hb + Hb2, :] for t in range(T)], axis=0)
    bands = bands.reshape(T, CB, Lb)
    bands = jnp.pad(bands, ((0, 0), (0, CBpad - CB), (0, Lt - Lb)))  # (T,CBpad,Lt)

    # ---- per-sublane depthwise tap weights: (cards*9, CBpad, 1) -------------
    wdw = dw_weights.astype(f32).reshape(cards, C, 9)
    wdw = jnp.transpose(wdw, (0, 2, 1))                  # (cards, 9, C)
    wdw = jnp.repeat(wdw, B, axis=2)                     # sublane s = c*B + b
    wdw = jnp.pad(wdw, ((0, 0), (0, 0), (0, CBpad - CB)))
    wcol = wdw.reshape(cards * 9, CBpad, 1)

    # ---- fusion 1x1 as a batch-block-diagonal matrix for the MXU ------------
    # out[co*B+b, p] = bias[co] + sum_{d,c} fusion_w[co, d*C+c] * dw_d[c*B+b, p]
    wf4 = fusion_w.astype(f32).reshape(C, cards, C)              # [co, d, c]
    eye = jnp.eye(B, dtype=f32)
    wmat = jnp.einsum('odc,bB->obdcB', wf4, eye)                 # (C,B,cards,C,B)
    wmat = wmat.reshape(CB, cards, CB)
    wmat = jnp.pad(wmat, ((0, CoBpad - CB), (0, 0), (0, CBpad - CB)))
    wmat = wmat.reshape(CoBpad, cards * CBpad)

    bias_col = jnp.pad(jnp.repeat(fusion_b.astype(f32), B), (0, CoBpad - CB))
    bias_col = bias_col[:, None]                                  # (CoBpad, 1)

    # ---- VMEM budget & cost hints -------------------------------------------
    blk_bytes = 4 * Lt * (CBpad + CoBpad) * 2            # double-buffered in+out
    scratch_bytes = 4 * cards * CBpad * Lt
    weight_bytes = 4 * (wcol.size + wmat.size + bias_col.size)
    vmem_limit = min(48 << 20,
                     max(16 << 20, blk_bytes + scratch_bytes + weight_bytes + (4 << 20)))
    flops = T * Lt * (2 * cards * 9 * CBpad + 2 * CoBpad * cards * CBpad)
    bytes_accessed = 4 * T * Lt * (CBpad + CoBpad) + weight_bytes

    kernel = functools.partial(_split_spatial_kernel,
                               cards=cards, wt=Wp, lt=Lt, cbp=CBpad)
    out = pl.pallas_call(
        kernel,
        out_shape=jax.ShapeDtypeStruct((T, CoBpad, Lt), f32),
        grid=(T,),
        in_specs=[
            pl.BlockSpec((cards * 9, CBpad, 1), lambda t: (0, 0, 0)),    # dw weights
            pl.BlockSpec((CoBpad, cards * CBpad), lambda t: (0, 0)),     # fusion matrix
            pl.BlockSpec((CoBpad, 1), lambda t: (0, 0)),                 # fusion bias
            pl.BlockSpec((1, CBpad, Lt), lambda t: (t, 0, 0)),           # band input
        ],
        out_specs=pl.BlockSpec((1, CoBpad, Lt), lambda t: (t, 0, 0)),
        scratch_shapes=[pltpu.VMEM((cards * CBpad, Lt), f32)],
        compiler_params=pltpu.CompilerParams(
            dimension_semantics=("parallel",),
            vmem_limit_bytes=vmem_limit),
        cost_estimate=pl.CostEstimate(
            flops=flops, transcendentals=0, bytes_accessed=bytes_accessed),
    )(wcol, wmat, bias_col, bands)

    # ---- crop the padded/flattened band domain back to (B, C, H, W) --------
    # (Kept in the wrapper for a self-contained demo; in production the packed
    #  lane-dense layout should be carried across adjacent layers instead.)
    out = out[:, :CB, :Lb].reshape(T, C, B, Hb2, Wp)
    out = out[:, :, :, P:P + Hb, P:P + W]                 # (T, C, B, Hb, W)
    out = jnp.transpose(out, (2, 1, 0, 3, 4)).reshape(B, C, H, W)
    return out


def split_spatial_conv_ref(x, dw_weights, fusion_w, fusion_b, *, cards):
    """Pure-JAX reference with identical semantics to the PyTorch module."""
    B, C, H, W = x.shape
    nets = []
    for i in range(cards):
        d = i + 1
        w = dw_weights[i][:, None, :, :]                 # (C, 1, 3, 3)
        nets.append(jax.lax.conv_general_dilated(
            x, w, window_strides=(1, 1), padding=((d, d), (d, d)),
            rhs_dilation=(d, d), feature_group_count=C,
            dimension_numbers=("NCHW", "OIHW", "NCHW")))
    cat = jnp.concatenate(nets, axis=1)                  # (B, C*cards, H, W)
    out = jax.lax.conv_general_dilated(
        cat, fusion_w[:, :, None, None], window_strides=(1, 1), padding="VALID",
        dimension_numbers=("NCHW", "OIHW", "NCHW"))
    return out + fusion_b[None, :, None, None]


if __name__ == "__main__":
    B, C, H, W = 2, 4, 16, 16
    cards = 4

    key = jax.random.PRNGKey(0)
    kx, kd, kf, kb = jax.random.split(key, 4)
    x = jax.random.normal(kx, (B, C, H, W), jnp.float32)
    dw = 0.2 * jax.random.normal(kd, (cards, C, 3, 3), jnp.float32)
    wf = 0.2 * jax.random.normal(kf, (C, C * cards), jnp.float32)
    bf = 0.1 * jax.random.normal(kb, (C,), jnp.float32)

    fwd = jax.jit(functools.partial(split_spatial_conv, cards=cards))
    out = jax.block_until_ready(fwd(x, dw, wf, bf))

    assert out.shape == (B, C, H, W) and out.dtype == jnp.float32
    ref = split_spatial_conv_ref(x, dw, wf, bf, cards=cards)
    max_err = float(jnp.max(jnp.abs(out - ref)))
    assert jnp.allclose(out, ref, atol=2e-3, rtol=2e-3), f"max_err={max_err}"
    print("KERNEL_OK")
</pallas_src>

<mosaic_0001>
module attributes {stable_mosaic.version = 11 : i64} {
  func.func @_split_spatial_kernel(%arg0: i32, %arg1: memref<36x8x1xf32, #tpu.memory_space<vmem>>, %arg2: memref<8x32xf32, #tpu.memory_space<vmem>>, %arg3: memref<8x1xf32, #tpu.memory_space<vmem>>, %arg4: memref<1x8x384xf32, #tpu.memory_space<vmem>>, %arg5: memref<1x8x384xf32, #tpu.memory_space<vmem>>, %arg6: memref<32x384xf32, #tpu.memory_space<vmem>>) attributes {dimension_semantics = [#tpu.dimension_semantics<parallel>], iteration_bounds = array<i64: 2>, scalar_prefetch = 0 : i64, scratch_operands = 1 : i64, tpu.core_type = #tpu.core_type<tc>, window_params = [{pipeline_mode = #tpu.pipeline_mode<synchronous>, transform_indices = @transform_0, window_bounds = array<i64: 36, 8, 1>}, {pipeline_mode = #tpu.pipeline_mode<synchronous>, transform_indices = @transform_1, window_bounds = array<i64: 8, 32>}, {pipeline_mode = #tpu.pipeline_mode<synchronous>, transform_indices = @transform_2, window_bounds = array<i64: 8, 1>}, {transform_indices = @transform_3, window_bounds = array<i64: 1, 8, 384>}, {transform_indices = @transform_4, window_bounds = array<i64: 1, 8, 384>}]} {
    %c0 = arith.constant 0 : index
    %c0_0 = arith.constant 0 : index
    %c0_1 = arith.constant 0 : index
    %0 = vector.load %arg4[%c0, %c0_0, %c0_1] : memref<1x8x384xf32, #tpu.memory_space<vmem>>, vector<1x8x384xf32>
    %1 = vector.shape_cast %0 : vector<1x8x384xf32> to vector<8x384xf32>
    %c4 = arith.constant 4 : index
    %c0_2 = arith.constant 0 : index
    %c0_3 = arith.constant 0 : index
    %2 = vector.load %arg1[%c4, %c0_2, %c0_3] : memref<36x8x1xf32, #tpu.memory_space<vmem>>, vector<1x8x1xf32>
    %3 = vector.shape_cast %2 : vector<1x8x1xf32> to vector<8x1xf32>
    %4 = vector.broadcast %3 : vector<8x1xf32> to vector<8x384xf32>
    %5 = arith.mulf %1, %4 : vector<8x384xf32>
    %c25_i32 = arith.constant 25 : i32
    %6 = tpu.dynamic_rotate %1 by %c25_i32 dim 1 : vector<8x384xf32>, i32 -> vector<8x384xf32>
    %c0_4 = arith.constant 0 : index
    %c0_5 = arith.constant 0 : index
    %c0_6 = arith.constant 0 : index
    %7 = vector.load %arg1[%c0_4, %c0_5, %c0_6] : memref<36x8x1xf32, #tpu.memory_space<vmem>>, vector<1x8x1xf32>
    %8 = vector.shape_cast %7 : vector<1x8x1xf32> to vector<8x1xf32>
    %9 = vector.broadcast %8 : vector<8x1xf32> to vector<8x384xf32>
    %10 = arith.mulf %6, %9 : vector<8x384xf32>
    %11 = arith.addf %5, %10 : vector<8x384xf32>
    %c24_i32 = arith.constant 24 : i32
    %12 = tpu.dynamic_rotate %1 by %c24_i32 dim 1 : vector<8x384xf32>, i32 -> vector<8x384xf32>
    %c1 = arith.constant 1 : index
    %c0_7 = arith.constant 0 : index
    %c0_8 = arith.constant 0 : index
    %13 = vector.load %arg1[%c1, %c0_7, %c0_8] : memref<36x8x1xf32, #tpu.memory_space<vmem>>, vector<1x8x1xf32>
    %14 = vector.shape_cast %13 : vector<1x8x1xf32> to vector<8x1xf32>
    %15 = vector.broadcast %14 : vector<8x1xf32> to vector<8x384xf32>
    %16 = arith.mulf %12, %15 : vector<8x384xf32>
    %17 = arith.addf %11, %16 : vector<8x384xf32>
    %c23_i32 = arith.constant 23 : i32
    %18 = tpu.dynamic_rotate %1 by %c23_i32 dim 1 : vector<8x384xf32>, i32 -> vector<8x384xf32>
    %c2 = arith.constant 2 : index
    %c0_9 = arith.constant 0 : index
    %c0_10 = arith.constant 0 : index
    %19 = vector.load %arg1[%c2, %c0_9, %c0_10] : memref<36x8x1xf32, #tpu.memory_space<vmem>>, vector<1x8x1xf32>
    %20 = vector.shape_cast %19 : vector<1x8x1xf32> to vector<8x1xf32>
    %21 = vector.broadcast %20 : vector<8x1xf32> to vector<8x384xf32>
    %22 = arith.mulf %18, %21 : vector<8x384xf32>
    %23 = arith.addf %17, %22 : vector<8x384xf32>
    %c1_i32 = arith.constant 1 : i32
    %24 = tpu.dynamic_rotate %1 by %c1_i32 dim 1 : vector<8x384xf32>, i32 -> vector<8x384xf32>
    %c3 = arith.constant 3 : index
    %c0_11 = arith.constant 0 : index
    %c0_12 = arith.constant 0 : index
    %25 = vector.load %arg1[%c3, %c0_11, %c0_12] : memref<36x8x1xf32, #tpu.memory_space<vmem>>, vector<1x8x1xf32>
    %26 = vector.shape_cast %25 : vector<1x8x1xf32> to vector<8x1xf32>
    %27 = vector.broadcast %26 : vector<8x1xf32> to vector<8x384xf32>
    %28 = arith.mulf %24, %27 : vector<8x384xf32>
    %29 = arith.addf %23, %28 : vector<8x384xf32>
    %c383_i32 = arith.constant 383 : i32
    %30 = tpu.dynamic_rotate %1 by %c383_i32 dim 1 : vector<8x384xf32>, i32 -> vector<8x384xf32>
    %c5 = arith.constant 5 : index
    %c0_13 = arith.constant 0 : index
    %c0_14 = arith.constant 0 : index
    %31 = vector.load %arg1[%c5, %c0_13, %c0_14] : memref<36x8x1xf32, #tpu.memory_space<vmem>>, vector<1x8x1xf32>
    %32 = vector.shape_cast %31 : vector<1x8x1xf32> to vector<8x1xf32>
    %33 = vector.broadcast %32 : vector<8x1xf32> to vector<8x384xf32>
    %34 = arith.mulf %30, %33 : vector<8x384xf32>
    %35 = arith.addf %29, %34 : vector<8x384xf32>
    %c361_i32 = arith.constant 361 : i32
    %36 = tpu.dynamic_rotate %1 by %c361_i32 dim 1 : vector<8x384xf32>, i32 -> vector<8x384xf32>
    %c6 = arith.constant 6 : index
    %c0_15 = arith.constant 0 : index
    %c0_16 = arith.constant 0 : index
    %37 = vector.load %arg1[%c6, %c0_15, %c0_16] : memref<36x8x1xf32, #tpu.memory_space<vmem>>, vector<1x8x1xf32>
    %38 = vector.shape_cast %37 : vector<1x8x1xf32> to vector<8x1xf32>
    %39 = vector.broadcast %38 : vector<8x1xf32> to vector<8x384xf32>
    %40 = arith.mulf %36, %39 : vector<8x384xf32>
    %41 = arith.addf %35, %40 : vector<8x384xf32>
    %c360_i32 = arith.constant 360 : i32
    %42 = tpu.dynamic_rotate %1 by %c360_i32 dim 1 : vector<8x384xf32>, i32 -> vector<8x384xf32>
    %c7 = arith.constant 7 : index
    %c0_17 = arith.constant 0 : index
    %c0_18 = arith.constant 0 : index
    %43 = vector.load %arg1[%c7, %c0_17, %c0_18] : memref<36x8x1xf32, #tpu.memory_space<vmem>>, vector<1x8x1xf32>
    %44 = vector.shape_cast %43 : vector<1x8x1xf32> to vector<8x1xf32>
    %45 = vector.broadcast %44 : vector<8x1xf32> to vector<8x384xf32>
    %46 = arith.mulf %42, %45 : vector<8x384xf32>
    %47 = arith.addf %41, %46 : vector<8x384xf32>
    %c359_i32 = arith.constant 359 : i32
    %48 = tpu.dynamic_rotate %1 by %c359_i32 dim 1 : vector<8x384xf32>, i32 -> vector<8x384xf32>
    %c8 = arith.constant 8 : index
    %c0_19 = arith.constant 0 : index
    %c0_20 = arith.constant 0 : index
    %49 = vector.load %arg1[%c8, %c0_19, %c0_20] : memref<36x8x1xf32, #tpu.memory_space<vmem>>, vector<1x8x1xf32>
    %50 = vector.shape_cast %49 : vector<1x8x1xf32> to vector<8x1xf32>
    %51 = vector.broadcast %50 : vector<8x1xf32> to vector<8x384xf32>
    %52 = arith.mulf %48, %51 : vector<8x384xf32>
    %53 = arith.addf %47, %52 : vector<8x384xf32>
    %c0_21 = arith.constant 0 : index
    %c0_22 = arith.constant 0 : index
    %54 = vector.load %arg6[%c0_21, %c0_22] : memref<32x384xf32, #tpu.memory_space<vmem>>, vector<8x384xf32>
    tpu.vector_store %arg6[%c0_21, %c0_22], %53 {strides = array<i32>} : memref<32x384xf32, #tpu.memory_space<vmem>>, vector<8x384xf32>,
    %c13 = arith.constant 13 : index
    %c0_23 = arith.constant 0 : index
    %c0_24 = arith.constant 0 : index
    %55 = vector.load %arg1[%c13, %c0_23, %c0_24] : memref<36x8x1xf32, #tpu.memory_space<vmem>>, vector<1x8x1xf32>
    %56 = vector.shape_cast %55 : vector<1x8x1xf32> to vector<8x1xf32>
    %57 = vector.broadcast %56 : vector<8x1xf32> to vector<8x384xf32>
    %58 = arith.mulf %1, %57 : vector<8x384xf32>
    %c50_i32 = arith.constant 50 : i32
    %59 = tpu.dynamic_rotate %1 by %c50_i32 dim 1 : vector<8x384xf32>, i32 -> vector<8x384xf32>
    %c9 = arith.constant 9 : index
    %c0_25 = arith.constant 0 : index
    %c0_26 = arith.constant 0 : index
    %60 = vector.load %arg1[%c9, %c0_25, %c0_26] : memref<36x8x1xf32, #tpu.memory_space<vmem>>, vector<1x8x1xf32>
    %61 = vector.shape_cast %60 : vector<1x8x1xf32> to vector<8x1xf32>
    %62 = vector.broadcast %61 : vector<8x1xf32> to vector<8x384xf32>
    %63 = arith.mulf %59, %62 : vector<8x384xf32>
    %64 = arith.addf %58, %63 : vector<8x384xf32>
    %c48_i32 = arith.constant 48 : i32
    %65 = tpu.dynamic_rotate %1 by %c48_i32 dim 1 : vector<8x384xf32>, i32 -> vector<8x384xf32>
    %c10 = arith.constant 10 : index
    %c0_27 = arith.constant 0 : index
    %c0_28 = arith.constant 0 : index
    %66 = vector.load %arg1[%c10, %c0_27, %c0_28] : memref<36x8x1xf32, #tpu.memory_space<vmem>>, vector<1x8x1xf32>
    %67 = vector.shape_cast %66 : vector<1x8x1xf32> to vector<8x1xf32>
    %68 = vector.broadcast %67 : vector<8x1xf32> to vector<8x384xf32>
    %69 = arith.mulf %65, %68 : vector<8x384xf32>
    %70 = arith.addf %64, %69 : vector<8x384xf32>
    %c46_i32 = arith.constant 46 : i32
    %71 = tpu.dynamic_rotate %1 by %c46_i32 dim 1 : vector<8x384xf32>, i32 -> vector<8x384xf32>
    %c11 = arith.constant 11 : index
    %c0_29 = arith.constant 0 : index
    %c0_30 = arith.constant 0 : index
    %72 = vector.load %arg1[%c11, %c0_29, %c0_30] : memref<36x8x1xf32, #tpu.memory_space<vmem>>, vector<1x8x1xf32>
    %73 = vector.shape_cast %72 : vector<1x8x1xf32> to vector<8x1xf32>
    %74 = vector.broadcast %73 : vector<8x1xf32> to vector<8x384xf32>
    %75 = arith.mulf %71, %74 : vector<8x384xf32>
    %76 = arith.addf %70, %75 : vector<8x384xf32>
    %c2_i32 = arith.constant 2 : i32
    %77 = tpu.dynamic_rotate %1 by %c2_i32 dim 1 : vector<8x384xf32>, i32 -> vector<8x384xf32>
    %c12 = arith.constant 12 : index
    %c0_31 = arith.constant 0 : index
    %c0_32 = arith.constant 0 : index
    %78 = vector.load %arg1[%c12, %c0_31, %c0_32] : memref<36x8x1xf32, #tpu.memory_space<vmem>>, vector<1x8x1xf32>
    %79 = vector.shape_cast %78 : vector<1x8x1xf32> to vector<8x1xf32>
    %80 = vector.broadcast %79 : vector<8x1xf32> to vector<8x384xf32>
    %81 = arith.mulf %77, %80 : vector<8x384xf32>
    %82 = arith.addf %76, %81 : vector<8x384xf32>
    %c382_i32 = arith.constant 382 : i32
    %83 = tpu.dynamic_rotate %1 by %c382_i32 dim 1 : vector<8x384xf32>, i32 -> vector<8x384xf32>
    %c14 = arith.constant 14 : index
    %c0_33 = arith.constant 0 : index
    %c0_34 = arith.constant 0 : index
    %84 = vector.load %arg1[%c14, %c0_33, %c0_34] : memref<36x8x1xf32, #tpu.memory_space<vmem>>, vector<1x8x1xf32>
    %85 = vector.shape_cast %84 : vector<1x8x1xf32> to vector<8x1xf32>
    %86 = vector.broadcast %85 : vector<8x1xf32> to vector<8x384xf32>
    %87 = arith.mulf %83, %86 : vector<8x384xf32>
    %88 = arith.addf %82, %87 : vector<8x384xf32>
    %c338_i32 = arith.constant 338 : i32
    %89 = tpu.dynamic_rotate %1 by %c338_i32 dim 1 : vector<8x384xf32>, i32 -> vector<8x384xf32>
    %c15 = arith.constant 15 : index
    %c0_35 = arith.constant 0 : index
    %c0_36 = arith.constant 0 : index
    %90 = vector.load %arg1[%c15, %c0_35, %c0_36] : memref<36x8x1xf32, #tpu.memory_space<vmem>>, vector<1x8x1xf32>
    %91 = vector.shape_cast %90 : vector<1x8x1xf32> to vector<8x1xf32>
    %92 = vector.broadcast %91 : vector<8x1xf32> to vector<8x384xf32>
    %93 = arith.mulf %89, %92 : vector<8x384xf32>
    %94 = arith.addf %88, %93 : vector<8x384xf32>
    %c336_i32 = arith.constant 336 : i32
    %95 = tpu.dynamic_rotate %1 by %c336_i32 dim 1 : vector<8x384xf32>, i32 -> vector<8x384xf32>
    %c16 = arith.constant 16 : index
    %c0_37 = arith.constant 0 : index
    %c0_38 = arith.constant 0 : index
    %96 = vector.load %arg1[%c16, %c0_37, %c0_38] : memref<36x8x1xf32, #tpu.memory_space<vmem>>, vector<1x8x1xf32>
    %97 = vector.shape_cast %96 : vector<1x8x1xf32> to vector<8x1xf32>
    %98 = vector.broadcast %97 : vector<8x1xf32> to vector<8x384xf32>
    %99 = arith.mulf %95, %98 : vector<8x384xf32>
    %100 = arith.addf %94, %99 : vector<8x384xf32>
    %c334_i32 = arith.constant 334 : i32
    %101 = tpu.dynamic_rotate %1 by %c334_i32 dim 1 : vector<8x384xf32>, i32 -> vector<8x384xf32>
    %c17 = arith.constant 17 : index
    %c0_39 = arith.constant 0 : index
    %c0_40 = arith.constant 0 : index
    %102 = vector.load %arg1[%c17, %c0_39, %c0_40] : memref<36x8x1xf32, #tpu.memory_space<vmem>>, vector<1x8x1xf32>
    %103 = vector.shape_cast %102 : vector<1x8x1xf32> to vector<8x1xf32>
    %104 = vector.broadcast %103 : vector<8x1xf32> to vector<8x384xf32>
    %105 = arith.mulf %101, %104 : vector<8x384xf32>
    %106 = arith.addf %100, %105 : vector<8x384xf32>
    %c8_41 = arith.constant 8 : index
    %c0_42 = arith.constant 0 : index
    %107 = vector.load %arg6[%c8_41, %c0_42] : memref<32x384xf32, #tpu.memory_space<vmem>>, vector<8x384xf32>
    tpu.vector_store %arg6[%c8_41, %c0_42], %106 {strides = array<i32>} : memref<32x384xf32, #tpu.memory_space<vmem>>, vector<8x384xf32>,
    %c22 = arith.constant 22 : index
    %c0_43 = arith.constant 0 : index
    %c0_44 = arith.constant 0 : index
    %108 = vector.load %arg1[%c22, %c0_43, %c0_44] : memref<36x8x1xf32, #tpu.memory_space<vmem>>, vector<1x8x1xf32>
    %109 = vector.shape_cast %108 : vector<1x8x1xf32> to vector<8x1xf32>
    %110 = vector.broadcast %109 : vector<8x1xf32> to vector<8x384xf32>
    %111 = arith.mulf %1, %110 : vector<8x384xf32>
    %c75_i32 = arith.constant 75 : i32
    %112 = tpu.dynamic_rotate %1 by %c75_i32 dim 1 : vector<8x384xf32>, i32 -> vector<8x384xf32>
    %c18 = arith.constant 18 : index
    %c0_45 = arith.constant 0 : index
    %c0_46 = arith.constant 0 : index
    %113 = vector.load %arg1[%c18, %c0_45, %c0_46] : memref<36x8x1xf32, #tpu.memory_space<vmem>>, vector<1x8x1xf32>
    %114 = vector.shape_cast %113 : vector<1x8x1xf32> to vector<8x1xf32>
    %115 = vector.broadcast %114 : vector<8x1xf32> to vector<8x384xf32>
    %116 = arith.mulf %112, %115 : vector<8x384xf32>
    %117 = arith.addf %111, %116 : vector<8x384xf32>
    %c72_i32 = arith.constant 72 : i32
    %118 = tpu.dynamic_rotate %1 by %c72_i32 dim 1 : vector<8x384xf32>, i32 -> vector<8x384xf32>
    %c19 = arith.constant 19 : index
    %c0_47 = arith.constant 0 : index
    %c0_48 = arith.constant 0 : index
    %119 = vector.load %arg1[%c19, %c0_47, %c0_48] : memref<36x8x1xf32, #tpu.memory_space<vmem>>, vector<1x8x1xf32>
    %120 = vector.shape_cast %119 : vector<1x8x1xf32> to vector<8x1xf32>
    %121 = vector.broadcast %120 : vector<8x1xf32> to vector<8x384xf32>
    %122 = arith.mulf %118, %121 : vector<8x384xf32>
    %123 = arith.addf %117, %122 : vector<8x384xf32>
    %c69_i32 = arith.constant 69 : i32
    %124 = tpu.dynamic_rotate %1 by %c69_i32 dim 1 : vector<8x384xf32>, i32 -> vector<8x384xf32>
    %c20 = arith.constant 20 : index
    %c0_49 = arith.constant 0 : index
    %c0_50 = arith.constant 0 : index
    %125 = vector.load %arg1[%c20, %c0_49, %c0_50] : memref<36x8x1xf32, #tpu.memory_space<vmem>>, vector<1x8x1xf32>
    %126 = vector.shape_cast %125 : vector<1x8x1xf32> to vector<8x1xf32>
    %127 = vector.broadcast %126 : vector<8x1xf32> to vector<8x384xf32>
    %128 = arith.mulf %124, %127 : vector<8x384xf32>
    %129 = arith.addf %123, %128 : vector<8x384xf32>
    %c3_i32 = arith.constant 3 : i32
    %130 = tpu.dynamic_rotate %1 by %c3_i32 dim 1 : vector<8x384xf32>, i32 -> vector<8x384xf32>
    %c21 = arith.constant 21 : index
    %c0_51 = arith.constant 0 : index
    %c0_52 = arith.constant 0 : index
    %131 = vector.load %arg1[%c21, %c0_51, %c0_52] : memref<36x8x1xf32, #tpu.memory_space<vmem>>, vector<1x8x1xf32>
    %132 = vector.shape_cast %131 : vector<1x8x1xf32> to vector<8x1xf32>
    %133 = vector.broadcast %132 : vector<8x1xf32> to vector<8x384xf32>
    %134 = arith.mulf %130, %133 : vector<8x384xf32>
    %135 = arith.addf %129, %134 : vector<8x384xf32>
    %c381_i32 = arith.constant 381 : i32
    %136 = tpu.dynamic_rotate %1 by %c381_i32 dim 1 : vector<8x384xf32>, i32 -> vector<8x384xf32>
    %c23 = arith.constant 23 : index
    %c0_53 = arith.constant 0 : index
    %c0_54 = arith.constant 0 : index
    %137 = vector.load %arg1[%c23, %c0_53, %c0_54] : memref<36x8x1xf32, #tpu.memory_space<vmem>>, vector<1x8x1xf32>
    %138 = vector.shape_cast %137 : vector<1x8x1xf32> to vector<8x1xf32>
    %139 = vector.broadcast %138 : vector<8x1xf32> to vector<8x384xf32>
    %140 = arith.mulf %136, %139 : vector<8x384xf32>
    %141 = arith.addf %135, %140 : vector<8x384xf32>
    %c315_i32 = arith.constant 315 : i32
    %142 = tpu.dynamic_rotate %1 by %c315_i32 dim 1 : vector<8x384xf32>, i32 -> vector<8x384xf32>
    %c24 = arith.constant 24 : index
    %c0_55 = arith.constant 0 : index
    %c0_56 = arith.constant 0 : index
    %143 = vector.load %arg1[%c24, %c0_55, %c0_56] : memref<36x8x1xf32, #tpu.memory_space<vmem>>, vector<1x8x1xf32>
    %144 = vector.shape_cast %143 : vector<1x8x1xf32> to vector<8x1xf32>
    %145 = vector.broadcast %144 : vector<8x1xf32> to vector<8x384xf32>
    %146 = arith.mulf %142, %145 : vector<8x384xf32>
    %147 = arith.addf %141, %146 : vector<8x384xf32>
    %c312_i32 = arith.constant 312 : i32
    %148 = tpu.dynamic_rotate %1 by %c312_i32 dim 1 : vector<8x384xf32>, i32 -> vector<8x384xf32>
    %c25 = arith.constant 25 : index
    %c0_57 = arith.constant 0 : index
    %c0_58 = arith.constant 0 : index
    %149 = vector.load %arg1[%c25, %c0_57, %c0_58] : memref<36x8x1xf32, #tpu.memory_space<vmem>>, vector<1x8x1xf32>
    %150 = vector.shape_cast %149 : vector<1x8x1xf32> to vector<8x1xf32>
    %151 = vector.broadcast %150 : vector<8x1xf32> to vector<8x384xf32>
    %152 = arith.mulf %148, %151 : vector<8x384xf32>
    %153 = arith.addf %147, %152 : vector<8x384xf32>
    %c309_i32 = arith.constant 309 : i32
    %154 = tpu.dynamic_rotate %1 by %c309_i32 dim 1 : vector<8x384xf32>, i32 -> vector<8x384xf32>
    %c26 = arith.constant 26 : index
    %c0_59 = arith.constant 0 : index
    %c0_60 = arith.constant 0 : index
    %155 = vector.load %arg1[%c26, %c0_59, %c0_60] : memref<36x8x1xf32, #tpu.memory_space<vmem>>, vector<1x8x1xf32>
    %156 = vector.shape_cast %155 : vector<1x8x1xf32> to vector<8x1xf32>
    %157 = vector.broadcast %156 : vector<8x1xf32> to vector<8x384xf32>
    %158 = arith.mulf %154, %157 : vector<8x384xf32>
    %159 = arith.addf %153, %158 : vector<8x384xf32>
    %c16_61 = arith.constant 16 : index
    %c0_62 = arith.constant 0 : index
    %160 = vector.load %arg6[%c16_61, %c0_62] : memref<32x384xf32, #tpu.memory_space<vmem>>, vector<8x384xf32>
    tpu.vector_store %arg6[%c16_61, %c0_62], %159 {strides = array<i32>} : memref<32x384xf32, #tpu.memory_space<vmem>>, vector<8x384xf32>,
    %c31 = arith.constant 31 : index
    %c0_63 = arith.constant 0 : index
    %c0_64 = arith.constant 0 : index
    %161 = vector.load %arg1[%c31, %c0_63, %c0_64] : memref<36x8x1xf32, #tpu.memory_space<vmem>>, vector<1x8x1xf32>
    %162 = vector.shape_cast %161 : vector<1x8x1xf32> to vector<8x1xf32>
    %163 = vector.broadcast %162 : vector<8x1xf32> to vector<8x384xf32>
    %164 = arith.mulf %1, %163 : vector<8x384xf32>
    %c100_i32 = arith.constant 100 : i32
    %165 = tpu.dynamic_rotate %1 by %c100_i32 dim 1 : vector<8x384xf32>, i32 -> vector<8x384xf32>
    %c27 = arith.constant 27 : index
    %c0_65 = arith.constant 0 : index
    %c0_66 = arith.constant 0 : index
    %166 = vector.load %arg1[%c27, %c0_65, %c0_66] : memref<36x8x1xf32, #tpu.memory_space<vmem>>, vector<1x8x1xf32>
    %167 = vector.shape_cast %166 : vector<1x8x1xf32> to vector<8x1xf32>
    %168 = vector.broadcast %167 : vector<8x1xf32> to vector<8x384xf32>
    %169 = arith.mulf %165, %168 : vector<8x384xf32>
    %170 = arith.addf %164, %169 : vector<8x384xf32>
    %c96_i32 = arith.constant 96 : i32
    %171 = tpu.dynamic_rotate %1 by %c96_i32 dim 1 : vector<8x384xf32>, i32 -> vector<8x384xf32>
    %c28 = arith.constant 28 : index
    %c0_67 = arith.constant 0 : index
    %c0_68 = arith.constant 0 : index
    %172 = vector.load %arg1[%c28, %c0_67, %c0_68] : memref<36x8x1xf32, #tpu.memory_space<vmem>>, vector<1x8x1xf32>
    %173 = vector.shape_cast %172 : vector<1x8x1xf32> to vector<8x1xf32>
    %174 = vector.broadcast %173 : vector<8x1xf32> to vector<8x384xf32>
    %175 = arith.mulf %171, %174 : vector<8x384xf32>
    %176 = arith.addf %170, %175 : vector<8x384xf32>
    %c92_i32 = arith.constant 92 : i32
    %177 = tpu.dynamic_rotate %1 by %c92_i32 dim 1 : vector<8x384xf32>, i32 -> vector<8x384xf32>
    %c29 = arith.constant 29 : index
    %c0_69 = arith.constant 0 : index
    %c0_70 = arith.constant 0 : index
    %178 = vector.load %arg1[%c29, %c0_69, %c0_70] : memref<36x8x1xf32, #tpu.memory_space<vmem>>, vector<1x8x1xf32>
    %179 = vector.shape_cast %178 : vector<1x8x1xf32> to vector<8x1xf32>
    %180 = vector.broadcast %179 : vector<8x1xf32> to vector<8x384xf32>
    %181 = arith.mulf %177, %180 : vector<8x384xf32>
    %182 = arith.addf %176, %181 : vector<8x384xf32>
    %c4_i32 = arith.constant 4 : i32
    %183 = tpu.dynamic_rotate %1 by %c4_i32 dim 1 : vector<8x384xf32>, i32 -> vector<8x384xf32>
    %c30 = arith.constant 30 : index
    %c0_71 = arith.constant 0 : index
    %c0_72 = arith.constant 0 : index
    %184 = vector.load %arg1[%c30, %c0_71, %c0_72] : memref<36x8x1xf32, #tpu.memory_space<vmem>>, vector<1x8x1xf32>
    %185 = vector.shape_cast %184 : vector<1x8x1xf32> to vector<8x1xf32>
    %186 = vector.broadcast %185 : vector<8x1xf32> to vector<8x384xf32>
    %187 = arith.mulf %183, %186 : vector<8x384xf32>
    %188 = arith.addf %182, %187 : vector<8x384xf32>
    %c380_i32 = arith.constant 380 : i32
    %189 = tpu.dynamic_rotate %1 by %c380_i32 dim 1 : vector<8x384xf32>, i32 -> vector<8x384xf32>
    %c32 = arith.constant 32 : index
    %c0_73 = arith.constant 0 : index
    %c0_74 = arith.constant 0 : index
    %190 = vector.load %arg1[%c32, %c0_73, %c0_74] : memref<36x8x1xf32, #tpu.memory_space<vmem>>, vector<1x8x1xf32>
    %191 = vector.shape_cast %190 : vector<1x8x1xf32> to vector<8x1xf32>
    %192 = vector.broadcast %191 : vector<8x1xf32> to vector<8x384xf32>
    %193 = arith.mulf %189, %192 : vector<8x384xf32>
    %194 = arith.addf %188, %193 : vector<8x384xf32>
    %c292_i32 = arith.constant 292 : i32
    %195 = tpu.dynamic_rotate %1 by %c292_i32 dim 1 : vector<8x384xf32>, i32 -> vector<8x384xf32>
    %c33 = arith.constant 33 : index
    %c0_75 = arith.constant 0 : index
    %c0_76 = arith.constant 0 : index
    %196 = vector.load %arg1[%c33, %c0_75, %c0_76] : memref<36x8x1xf32, #tpu.memory_space<vmem>>, vector<1x8x1xf32>
    %197 = vector.shape_cast %196 : vector<1x8x1xf32> to vector<8x1xf32>
    %198 = vector.broadcast %197 : vector<8x1xf32> to vector<8x384xf32>
    %199 = arith.mulf %195, %198 : vector<8x384xf32>
    %200 = arith.addf %194, %199 : vector<8x384xf32>
    %c288_i32 = arith.constant 288 : i32
    %201 = tpu.dynamic_rotate %1 by %c288_i32 dim 1 : vector<8x384xf32>, i32 -> vector<8x384xf32>
    %c34 = arith.constant 34 : index
    %c0_77 = arith.constant 0 : index
    %c0_78 = arith.constant 0 : index
    %202 = vector.load %arg1[%c34, %c0_77, %c0_78] : memref<36x8x1xf32, #tpu.memory_space<vmem>>, vector<1x8x1xf32>
    %203 = vector.shape_cast %202 : vector<1x8x1xf32> to vector<8x1xf32>
    %204 = vector.broadcast %203 : vector<8x1xf32> to vector<8x384xf32>
    %205 = arith.mulf %201, %204 : vector<8x384xf32>
    %206 = arith.addf %200, %205 : vector<8x384xf32>
    %c284_i32 = arith.constant 284 : i32
    %207 = tpu.dynamic_rotate %1 by %c284_i32 dim 1 : vector<8x384xf32>, i32 -> vector<8x384xf32>
    %c35 = arith.constant 35 : index
    %c0_79 = arith.constant 0 : index
    %c0_80 = arith.constant 0 : index
    %208 = vector.load %arg1[%c35, %c0_79, %c0_80] : memref<36x8x1xf32, #tpu.memory_space<vmem>>, vector<1x8x1xf32>
    %209 = vector.shape_cast %208 : vector<1x8x1xf32> to vector<8x1xf32>
    %210 = vector.broadcast %209 : vector<8x1xf32> to vector<8x384xf32>
    %211 = arith.mulf %207, %210 : vector<8x384xf32>
    %212 = arith.addf %206, %211 : vector<8x384xf32>
    %c24_81 = arith.constant 24 : index
    %c0_82 = arith.constant 0 : index
    %213 = vector.load %arg6[%c24_81, %c0_82] : memref<32x384xf32, #tpu.memory_space<vmem>>, vector<8x384xf32>
    tpu.vector_store %arg6[%c24_81, %c0_82], %212 {strides = array<i32>} : memref<32x384xf32, #tpu.memory_space<vmem>>, vector<8x384xf32>,
    %c0_83 = arith.constant 0 : index
    %c0_84 = arith.constant 0 : index
    %214 = vector.load %arg2[%c0_83, %c0_84] : memref<8x32xf32, #tpu.memory_space<vmem>>, vector<8x32xf32>
    %c0_85 = arith.constant 0 : index
    %c0_86 = arith.constant 0 : index
    %215 = vector.load %arg6[%c0_85, %c0_86] : memref<32x384xf32, #tpu.memory_space<vmem>>, vector<32x384xf32>
    %cst = arith.constant dense<0.000000e+00> : vector<8x384xf32>
    %216 = tpu.matmul %214, %215, %cst {dimension_numbers = #tpu.dot_dimension_numbers<[1], [0], [0], [1], [0, 0, 1, 1], [], []>} : vector<8x32xf32>, vector<32x384xf32>, vector<8x384xf32> -> vector<8x384xf32>
    %c0_87 = arith.constant 0 : index
    %c0_88 = arith.constant 0 : index
    %217 = vector.load %arg3[%c0_87, %c0_88] : memref<8x1xf32, #tpu.memory_space<vmem>>, vector<8x1xf32>
    %218 = vector.broadcast %217 : vector<8x1xf32> to vector<8x384xf32>
    %219 = arith.addf %216, %218 : vector<8x384xf32>
    %c0_89 = arith.constant 0 : index
    %c0_90 = arith.constant 0 : index
    %c0_91 = arith.constant 0 : index
    %220 = vector.load %arg5[%c0_89, %c0_90, %c0_91] : memref<1x8x384xf32, #tpu.memory_space<vmem>>, vector<1x8x384xf32>
    %221 = vector.shape_cast %220 : vector<1x8x384xf32> to vector<8x384xf32>
    %222 = vector.shape_cast %219 : vector<8x384xf32> to vector<1x8x384xf32>
    tpu.vector_store %arg5[%c0_89, %c0_90, %c0_91], %222 {strides = array<i32>} : memref<1x8x384xf32, #tpu.memory_space<vmem>>, vector<1x8x384xf32>,
    return
  }
  func.func @transform_0(%arg0: i32) -> (i32, i32, i32) {
    %c0_i32 = arith.constant 0 : i32
    %c0_i32_0 = arith.constant 0 : i32
    %c0_i32_1 = arith.constant 0 : i32
    %c0_i32_2 = arith.constant 0 : i32
    return %c0_i32, %c0_i32_0, %c0_i32_1 : i32, i32, i32
  }
  func.func @transform_1(%arg0: i32) -> (i32, i32) {
    %c0_i32 = arith.constant 0 : i32
    %c0_i32_0 = arith.constant 0 : i32
    %c0_i32_1 = arith.constant 0 : i32
    return %c0_i32, %c0_i32_0 : i32, i32
  }
  func.func @transform_2(%arg0: i32) -> (i32, i32) {
    %c0_i32 = arith.constant 0 : i32
    %c0_i32_0 = arith.constant 0 : i32
    %c0_i32_1 = arith.constant 0 : i32
    return %c0_i32, %c0_i32_0 : i32, i32
  }
  func.func @transform_3(%arg0: i32) -> (i32, i32, i32) {
    %c0_i32 = arith.constant 0 : i32
    %c0_i32_0 = arith.constant 0 : i32
    %c0_i32_1 = arith.constant 0 : i32
    return %arg0, %c0_i32, %c0_i32_0 : i32, i32, i32
  }
  func.func @transform_4(%arg0: i32) -> (i32, i32, i32) {
    %c0_i32 = arith.constant 0 : i32
    %c0_i32_0 = arith.constant 0 : i32
    %c0_i32_1 = arith.constant 0 : i32
    return %arg0, %c0_i32, %c0_i32_0 : i32, i32, i32
  }
}

</mosaic_0001>

<llo_original>
// kernel: split_spatial_conv.1
$region0: #{split_spatial_conv.1}
  #allocation0 [shape = 'u32[]', space=smem, size = 0x4, offset = 0x4, fixed_abs, tag = 'smem constant byte address 0x4 - core index']
  #allocation1 [shape = 'u32[144,128]{1,0:T(1,128)}', space=vmem, size = 0x12000, scoped, tag = 'internal scratch']
  #allocation2 [shape = 'f32[32,384]{1,0:T(8,128)}', space=vmem, size = 0xc000, scoped, tag = 'scratch operand']
  %s0 = inlined_call_operand.vmem [shape: f32[36,8,1], index: 0, kind: input, shape index: {}]
  %s1 = inlined_call_operand.vmem [shape: f32[8,32], index: 1, kind: input, shape index: {}]
  %s2 = inlined_call_operand.vmem [shape: f32[8,1], index: 2, kind: input, shape index: {}]
  %s3 = inlined_call_operand.vmem [shape: f32[2,8,384], index: 3, kind: input, shape index: {}]
  %s4 = inlined_call_operand.vmem [shape: f32[2,8,384], index: 4, kind: output, shape index: {}]
  %s5 = sld [smem:[#allocation0]]
  $region49: #{split_spatial_conv.1} parent=0
    _
  %s7 = ssub.s32 1, %s5
  %s8 = scalar_select 0, %s7, %s5
  loop: start=0, step=1, limit=4
  $region2: #{split_spatial_conv.1} parent=0 // loop_pre_header
    _
  $region3: #{split_spatial_conv.1} parent=0 // loop_header
    %s10 = sphi 0, %s14
    %p11 = scmp.ge.s32.totalorder %s10, 4
    %s18 = sphi 0, %s18
    %s20 = sphi 0, %s18
    %s21 = sphi 0, %s20
    %s35 = sphi 0, %s21
    %s39 = sphi 0, %s39
    %s41 = sphi 0, %s39
    %s42 = sphi 0, %s41
    %s56 = sphi 0, %s42
    %s60 = sphi 0, %s60
    %s62 = sphi 0, %s60
    %s63 = sphi 0, %s62
    %s77 = sphi 0, %s63
    %s83 = sphi 0, %s85
    %s86 = sphi 0, %s83
    %s87 = sphi 0, %s86
    %s103 = sphi 0, %s87
    %s109 = sphi 0, %s111
    %s112 = sphi 0, %s109
    %s113 = sphi 0, %s112
    %s129 = sphi 0, %s113
  $region4: #{split_spatial_conv.1} parent=0 // loop_header_branch
    %13 = sbr.rel (%p11) target = $region8
  $region5: #{split_spatial_conv.1} parent=0 // loop_body
    %s15 = ssub.s32 %s10, 1
    %s16 = ssub.s32 %s10, 2
    %s17 = sadd.s32 %s10, 1
    %s19 = sadd.s32 %s18, 1
    %p22 = scmp.eq.s32.totalorder %s10, 1
    %p23 = scmp.ne.s32.totalorder %s18, %s20
    %p24 = scmp.eq.s32.totalorder %s10, 0
    %p25 = por %p23, %p24
    %p26 = scmp.ne.s32.totalorder %s18, %s20
    %p27 = scmp.eq.s32.totalorder %s15, 1
    %p28 = por %p26, %p27
    %p29 = scmp.ne.s32.totalorder %s20, %s21
    %p30 = scmp.eq.s32.totalorder %s15, 0
    %p31 = por %p29, %p30
    %p32 = scmp.ne.s32.totalorder %s20, %s21
    %p33 = scmp.eq.s32.totalorder %s16, 1
    %p34 = por %p32, %p33
    %p36 = scmp.ne.s32.totalorder %s21, %s35
    %p37 = scmp.eq.s32.totalorder %s16, 0
    %p38 = por %p36, %p37
    %s40 = sadd.s32 %s39, 1
    %p43 = scmp.eq.s32.totalorder %s10, 1
    %p44 = scmp.ne.s32.totalorder %s39, %s41
    %p45 = scmp.eq.s32.totalorder %s10, 0
    %p46 = por %p44, %p45
    %p47 = scmp.ne.s32.totalorder %s39, %s41
    %p48 = scmp.eq.s32.totalorder %s15, 1
    %p49 = por %p47, %p48
    %p50 = scmp.ne.s32.totalorder %s41, %s42
    %p51 = scmp.eq.s32.totalorder %s15, 0
    %p52 = por %p50, %p51
    %p53 = scmp.ne.s32.totalorder %s41, %s42
    %p54 = scmp.eq.s32.totalorder %s16, 1
    %p55 = por %p53, %p54
    %p57 = scmp.ne.s32.totalorder %s42, %s56
    %p58 = scmp.eq.s32.totalorder %s16, 0
    %p59 = por %p57, %p58
    %s61 = sadd.s32 %s60, 1
    %p64 = scmp.eq.s32.totalorder %s10, 1
    %p65 = scmp.ne.s32.totalorder %s60, %s62
    %p66 = scmp.eq.s32.totalorder %s10, 0
    %p67 = por %p65, %p66
    %p68 = scmp.ne.s32.totalorder %s60, %s62
    %p69 = scmp.eq.s32.totalorder %s15, 1
    %p70 = por %p68, %p69
    %p71 = scmp.ne.s32.totalorder %s62, %s63
    %p72 = scmp.eq.s32.totalorder %s15, 0
    %p73 = por %p71, %p72
    %p74 = scmp.ne.s32.totalorder %s62, %s63
    %p75 = scmp.eq.s32.totalorder %s16, 1
    %p76 = por %p74, %p75
    %p78 = scmp.ne.s32.totalorder %s63, %s77
    %p79 = scmp.eq.s32.totalorder %s16, 0
    %p80 = por %p78, %p79
    %s81 = ssub.s32 %s10, %s17
    %p82 = scmp.eq.s32.totalorder %s81, 0
    %s84 = sadd.s32 %s83, 1
    %s85 = scalar_select %p82, %s83, %s84
    %p88 = pneg %p82
    %p89 = scmp.eq.s32.totalorder %s10, 1
    %p90 = por %p88, %p89
    %p91 = scmp.ne.s32.totalorder %s83, %s86
    %p92 = scmp.eq.s32.totalorder %s10, 0
    %p93 = por %p91, %p92
    %p94 = scmp.ne.s32.totalorder %s83, %s86
    %p95 = scmp.eq.s32.totalorder %s15, 1
    %p96 = por %p94, %p95
    %p97 = scmp.ne.s32.totalorder %s86, %s87
    %p98 = scmp.eq.s32.totalorder %s15, 0
    %p99 = por %p97, %p98
    %p100 = scmp.ne.s32.totalorder %s86, %s87
    %p101 = scmp.eq.s32.totalorder %s16, 1
    %p102 = por %p100, %p101
    %p104 = scmp.ne.s32.totalorder %s87, %s103
    %p105 = scmp.eq.s32.totalorder %s16, 0
    %p106 = por %p104, %p105
    %s107 = ssub.s32 %s10, %s17
    %p108 = scmp.eq.s32.totalorder %s107, 0
    %s110 = sadd.s32 %s109, 1
    %s111 = scalar_select %p108, %s109, %s110
    %p114 = pneg %p108
    %p115 = scmp.eq.s32.totalorder %s10, 1
    %p116 = por %p114, %p115
    %p117 = scmp.ne.s32.totalorder %s109, %s112
    %p118 = scmp.eq.s32.totalorder %s10, 0
    %p119 = por %p117, %p118
    %p120 = scmp.ne.s32.totalorder %s109, %s112
    %p121 = scmp.eq.s32.totalorder %s15, 1
    %p122 = por %p120, %p121
    %p123 = scmp.ne.s32.totalorder %s112, %s113
    %p124 = scmp.eq.s32.totalorder %s15, 0
    %p125 = por %p123, %p124
    %p126 = scmp.ne.s32.totalorder %s112, %s113
    %p127 = scmp.eq.s32.totalorder %s16, 1
    %p128 = por %p126, %p127
    %p130 = scmp.ne.s32.totalorder %s113, %s129
    %p131 = scmp.eq.s32.totalorder %s16, 0
    %p132 = por %p130, %p131
    %p133 = scmp.le.s32.totalorder 1, %s10
    %p134 = scmp.lt.s32.totalorder %s10, 3
    %p135 = pnand %p133, %p134
    %p136 = pneg %p135
    // Predicated region
    $region9: #{split_spatial_conv.1} parent=5 // pred_check
      _
    $region10: #{split_spatial_conv.1} parent=5 // pred_check_branch
      %138 = sbr.rel (%p135) target = $region12
    $region11: #{split_spatial_conv.1} parent=5 // pred_region
      %s139 = ssub.s32 %s10, 1
      // Predicated region
      $region13: #{split_spatial_conv.1} parent=11 // pred_check
        %p140 = pneg %p31
      $region14: #{split_spatial_conv.1} parent=11 // pred_check_branch
        %142 = sbr.rel (%p140) target = $region16
      $region15: #{split_spatial_conv.1} parent=11 // pred_region
        _
      $region16: #{split_spatial_conv.1} parent=11 // pred_fallthru
        _
      // Predicated region
      $region17: #{split_spatial_conv.1} parent=11 // pred_check
        %p143 = pneg %p52
      $region18: #{split_spatial_conv.1} parent=11 // pred_check_branch
        %145 = sbr.rel (%p143) target = $region20
      $region19: #{split_spatial_conv.1} parent=11 // pred_region
        _
      $region20: #{split_spatial_conv.1} parent=11 // pred_fallthru
        _
      // Predicated region
      $region21: #{split_spatial_conv.1} parent=11 // pred_check
        %p146 = pneg %p73
      $region22: #{split_spatial_conv.1} parent=11 // pred_check_branch
        %148 = sbr.rel (%p146) target = $region24
      $region23: #{split_spatial_conv.1} parent=11 // pred_region
        _
      $region24: #{split_spatial_conv.1} parent=11 // pred_fallthru
        _
    $region12: #{split_spatial_conv.1} parent=5 // pred_fallthru
      _
    %p149 = scmp.lt.s32.totalorder %s10, 2
    // Predicated region
    $region25: #{split_spatial_conv.1} parent=5 // pred_check
      %p150 = pneg %p149
    $region26: #{split_spatial_conv.1} parent=5 // pred_check_branch
      %152 = sbr.rel (%p150) target = $region28
    $region27: #{split_spatial_conv.1} parent=5 // pred_region
      // Predicated region
      $region29: #{split_spatial_conv.1} parent=27 // pred_check
        %p153 = pneg %p93
      $region30: #{split_spatial_conv.1} parent=27 // pred_check_branch
        %155 = sbr.rel (%p153) target = $region32
      $region31: #{split_spatial_conv.1} parent=27 // pred_region
        %p156 = scmp.lt.s32.totalorder %s10, 1
        %s157 = scalar_select %p156, %s10, 1
        %s158 = smul.addr %s157, 3
        %s159 = smul.addr %s158, 8
        %s160 = scalar_lea.vmem %s3, %s159
      $region32: #{split_spatial_conv.1} parent=27 // pred_fallthru
        _
    $region28: #{split_spatial_conv.1} parent=5 // pred_fallthru
      _
    %p161 = scmp.le.s32.totalorder 1, %s10
    %p162 = scmp.lt.s32.totalorder %s10, 3
    %p163 = pnand %p161, %p162
    %p164 = pneg %p163
    // Predicated region
    $region33: #{split_spatial_conv.1} parent=5 // pred_check
      _
    $region34: #{split_spatial_conv.1} parent=5 // pred_check_branch
      %166 = sbr.rel (%p163) target = $region36
    $region35: #{split_spatial_conv.1} parent=5 // pred_region
      %s167 = ssub.s32 %s10, 1
      %p168 = pneg %p31
      %p169 = pneg %p28
      %p170 = pneg %p52
      %p171 = pneg %p49
      %p172 = pneg %p73
      %p173 = pneg %p70
      %p174 = scmp.lt.s32.totalorder %s15, 1
      %s175 = scalar_select %p174, %s15, 1
      %s176 = smul.addr %s175, 3
      %s177 = smul.addr %s176, 8
      %s178 = scalar_lea.vmem %s3, %s177
      %p179 = pneg %p99
      %p180 = pneg %p96
      %p181 = pneg %p125
      %p182 = pneg %p122
      %p183 = scmp.lt.s32.totalorder %s15, 1
      %s184 = scalar_select %p183, %s15, 1
      %s185 = smul.addr %s184, 3
      %s186 = smul.addr %s185, 8
      %s187 = scalar_lea.vmem %s4, %s186
      %p188 = scmp.lt.s32.totalorder %s15, 1
      %s189 = scalar_select %p188, %s15, 1
      %s190 = smul.addr %s189, 3
      %s191 = smul.addr %s190, 8
      %s192 = scalar_lea.vmem %s3, %s191
      %p193 = scmp.lt.s32.totalorder %s15, 1
      %s194 = scalar_select %p193, %s15, 1
      %s195 = smul.addr %s194, 3
      %s196 = smul.addr %s195, 8
      %s197 = scalar_lea.vmem %s4, %s196
      %v198 = vld [vmem:[%s192] sm:$0xff]
      %v199 = vld [vmem:[%s192 + $0x8] sm:$0xff]
      %v200 = vld [vmem:[%s192 + $0x10] sm:$0xff]
      %s201 = scalar_lea.vmem %s0, 32
      %v202 = vld [vmem:[%s201] sm:$0xff]
      %204 = vset.pattern.permute.xlu0 0
      %205 = vperm.xlu0 %204, %v202
      %v206 = vpop.permute.xlu0 %205
      %v208 = vmul.f32 %v198, %v206
      %v209 = vmul.f32 %v199, %v206
      %v210 = vmul.f32 %v200, %v206
      %211 = vrot.lane.b32.xlu0 %v198, 25
      %v212 = vpop.permute.xlu0 %211
      %213 = vrot.lane.b32.xlu0 %v199, 25
      %v214 = vpop.permute.xlu0 %213
      %215 = vrot.lane.b32.xlu0 %v200, 25
      %v216 = vpop.permute.xlu0 %215
      %v217 = vlaneseq
      %v218 = vand.u32 %v217, 127
      %vm219 = vcmp.lt.s32.totalorder %v218, 25
      %v220 = vsel %vm219, %v214, %v216
      %v221 = vsel %vm219, %v212, %v214
      %v222 = vsel %vm219, %v216, %v212
      %v223 = vld [vmem:[%s0] sm:$0xff]
      %225 = vset.pattern.permute.xlu0 0
      %226 = vperm.xlu0 %225, %v223
      %v227 = vpop.permute.xlu0 %226
      %v229 = vmul.f32 %v222, %v227
      %v230 = vmul.f32 %v221, %v227
      %v231 = vmul.f32 %v220, %v227
      %v232 = vadd.f32 %v208, %v229
      %v233 = vadd.f32 %v209, %v230
      %v234 = vadd.f32 %v210, %v231
      %235 = vrot.lane.b32.xlu0 %v198, 24
      %v236 = vpop.permute.xlu0 %235
      %237 = vrot.lane.b32.xlu0 %v199, 24
      %v238 = vpop.permute.xlu0 %237
      %239 = vrot.lane.b32.xlu0 %v200, 24
      %v240 = vpop.permute.xlu0 %239
      %vm241 = vcmp.lt.s32.totalorder %v218, 24
      %v242 = vsel %vm241, %v238, %v240
      %v243 = vsel %vm241, %v236, %v238
      %v244 = vsel %vm241, %v240, %v236
      %s245 = scalar_lea.vmem %s0, 8
      %v246 = vld [vmem:[%s245] sm:$0xff]
      %248 = vset.pattern.permute.xlu0 0
      %249 = vperm.xlu0 %248, %v246
      %v250 = vpop.permute.xlu0 %249
      %v252 = vmul.f32 %v244, %v250
      %v253 = vmul.f32 %v243, %v250
      %v254 = vmul.f32 %v242, %v250
      %v255 = vadd.f32 %v232, %v252
      %v256 = vadd.f32 %v233, %v253
      %v257 = vadd.f32 %v234, %v254
      %258 = vrot.lane.b32.xlu0 %v198, 23
      %v259 = vpop.permute.xlu0 %258
      %260 = vrot.lane.b32.xlu0 %v199, 23
      %v261 = vpop.permute.xlu0 %260
      %262 = vrot.lane.b32.xlu0 %v200, 23
      %v263 = vpop.permute.xlu0 %262
      %vm264 = vcmp.lt.s32.totalorder %v218, 23
      %v265 = vsel %vm264, %v261, %v263
      %v266 = vsel %vm264, %v259, %v261
      %v267 = vsel %vm264, %v263, %v259
      %s268 = scalar_lea.vmem %s0, 16
      %v269 = vld [vmem:[%s268] sm:$0xff]
      %271 = vset.pattern.permute.xlu0 0
      %272 = vperm.xlu0 %271, %v269
      %v273 = vpop.permute.xlu0 %272
      %v275 = vmul.f32 %v267, %v273
      %v276 = vmul.f32 %v266, %v273
      %v277 = vmul.f32 %v265, %v273
      %v278 = vadd.f32 %v255, %v275
      %v279 = vadd.f32 %v256, %v276
      %v280 = vadd.f32 %v257, %v277
      %281 = vrot.lane.b32.xlu0 %v198, 1
      %v282 = vpop.permute.xlu0 %281
      %283 = vrot.lane.b32.xlu0 %v199, 1
      %v284 = vpop.permute.xlu0 %283
      %285 = vrot.lane.b32.xlu0 %v200, 1
      %v286 = vpop.permute.xlu0 %285
      %vm287 = vcmp.lt.s32.totalorder %v218, 1
      %v288 = vsel %vm287, %v284, %v286
      %v289 = vsel %vm287, %v282, %v284
      %v290 = vsel %vm287, %v286, %v282
      %s291 = scalar_lea.vmem %s0, 24
      %v292 = vld [vmem:[%s291] sm:$0xff]
      %294 = vset.pattern.permute.xlu0 0
      %295 = vperm.xlu0 %294, %v292
      %v296 = vpop.permute.xlu0 %295
      %v298 = vmul.f32 %v290, %v296
      %v299 = vmul.f32 %v289, %v296
      %v300 = vmul.f32 %v288, %v296
      %v301 = vadd.f32 %v278, %v298
      %v302 = vadd.f32 %v279, %v299
      %v303 = vadd.f32 %v280, %v300
      %304 = vrot.lane.b32.xlu0 %v198, 127
      %v305 = vpop.permute.xlu0 %304
      %306 = vrot.lane.b32.xlu0 %v199, 127
      %v307 = vpop.permute.xlu0 %306
      %308 = vrot.lane.b32.xlu0 %v200, 127
      %v309 = vpop.permute.xlu0 %308
      %vm310 = vcmp.lt.s32.totalorder %v218, 127
      %v311 = vsel %vm310, %v307, %v309
      %v312 = vsel %vm310, %v305, %v307
      %v313 = vsel %vm310, %v309, %v305
      %s314 = scalar_lea.vmem %s0, 40
      %v315 = vld [vmem:[%s314] sm:$0xff]
      %317 = vset.pattern.permute.xlu0 0
      %318 = vperm.xlu0 %317, %v315
      %v319 = vpop.permute.xlu0 %318
      %v321 = vmul.f32 %v312, %v319
      %v322 = vmul.f32 %v311, %v319
      %v323 = vmul.f32 %v313, %v319
      %v324 = vadd.f32 %v301, %v321
      %v325 = vadd.f32 %v302, %v322
      %v326 = vadd.f32 %v303, %v323
      %327 = vrot.lane.b32.xlu0 %v198, 105
      %v328 = vpop.permute.xlu0 %327
      %329 = vrot.lane.b32.xlu0 %v199, 105
      %v330 = vpop.permute.xlu0 %329
      %331 = vrot.lane.b32.xlu0 %v200, 105
      %v332 = vpop.permute.xlu0 %331
      %vm333 = vcmp.lt.s32.totalorder %v218, 105
      %v334 = vsel %vm333, %v330, %v332
      %v335 = vsel %vm333, %v328, %v330
      %v336 = vsel %vm333, %v332, %v328
      %s337 = scalar_lea.vmem %s0, 48
      %v338 = vld [vmem:[%s337] sm:$0xff]
      %340 = vset.pattern.permute.xlu0 0
      %341 = vperm.xlu0 %340, %v338
      %v342 = vpop.permute.xlu0 %341
      %v344 = vmul.f32 %v335, %v342
      %v345 = vmul.f32 %v334, %v342
      %v346 = vmul.f32 %v336, %v342
      %v347 = vadd.f32 %v324, %v344
      %v348 = vadd.f32 %v325, %v345
      %v349 = vadd.f32 %v326, %v346
      %350 = vrot.lane.b32.xlu0 %v198, 104
      %v351 = vpop.permute.xlu0 %350
      %352 = vrot.lane.b32.xlu0 %v199, 104
      %v353 = vpop.permute.xlu0 %352
      %354 = vrot.lane.b32.xlu0 %v200, 104
      %v355 = vpop.permute.xlu0 %354
      %vm356 = vcmp.lt.s32.totalorder %v218, 104
      %v357 = vsel %vm356, %v353, %v355
      %v358 = vsel %vm356, %v351, %v353
      %v359 = vsel %vm356, %v355, %v351
      %s360 = scalar_lea.vmem %s0, 56
      %v361 = vld [vmem:[%s360] sm:$0xff]
      %363 = vset.pattern.permute.xlu0 0
      %364 = vperm.xlu0 %363, %v361
      %v365 = vpop.permute.xlu0 %364
      %v367 = vmul.f32 %v358, %v365
      %v368 = vmul.f32 %v357, %v365
      %v369 = vmul.f32 %v359, %v365
      %v370 = vadd.f32 %v347, %v367
      %v371 = vadd.f32 %v348, %v368
      %v372 = vadd.f32 %v349, %v369
      %373 = vrot.lane.b32.xlu0 %v198, 103
      %v374 = vpop.permute.xlu0 %373
      %375 = vrot.lane.b32.xlu0 %v199, 103
      %v376 = vpop.permute.xlu0 %375
      %377 = vrot.lane.b32.xlu0 %v200, 103
      %v378 = vpop.permute.xlu0 %377
      %vm379 = vcmp.lt.s32.totalorder %v218, 103
      %v380 = vsel %vm379, %v376, %v378
      %v381 = vsel %vm379, %v374, %v376
      %v382 = vsel %vm379, %v378, %v374
      %s383 = scalar_lea.vmem %s0, 64
      %v384 = vld [vmem:[%s383] sm:$0xff]
      %386 = vset.pattern.permute.xlu0 0
      %387 = vperm.xlu0 %386, %v384
      %v388 = vpop.permute.xlu0 %387
      %v390 = vmul.f32 %v381, %v388
      %v391 = vmul.f32 %v380, %v388
      %v392 = vmul.f32 %v382, %v388
      %v393 = vadd.f32 %v370, %v390
      %v394 = vadd.f32 %v371, %v391
      %v395 = vadd.f32 %v372, %v392
      %396 = vst [vmem:[#allocation2] sm:$0xff] %v393
      %397 = vst [vmem:[#allocation2 + $0x8] sm:$0xff] %v394
      %398 = vst [vmem:[#allocation2 + $0x10] sm:$0xff] %v395
      %s399 = scalar_lea.vmem %s0, 104
      %v400 = vld [vmem:[%s399] sm:$0xff]
      %402 = vset.pattern.permute.xlu0 0
      %403 = vperm.xlu0 %402, %v400
      %v404 = vpop.permute.xlu0 %403
      %v406 = vmul.f32 %v198, %v404
      %v407 = vmul.f32 %v199, %v404
      %v408 = vmul.f32 %v200, %v404
      %409 = vrot.lane.b32.xlu0 %v198, 50
      %v410 = vpop.permute.xlu0 %409
      %411 = vrot.lane.b32.xlu0 %v199, 50
      %v412 = vpop.permute.xlu0 %411
      %413 = vrot.lane.b32.xlu0 %v200, 50
      %v414 = vpop.permute.xlu0 %413
      %vm415 = vcmp.lt.s32.totalorder %v218, 50
      %v416 = vsel %vm415, %v412, %v414
      %v417 = vsel %vm415, %v410, %v412
      %v418 = vsel %vm415, %v414, %v410
      %s419 = scalar_lea.vmem %s0, 72
      %v420 = vld [vmem:[%s419] sm:$0xff]
      %422 = vset.pattern.permute.xlu0 0
      %423 = vperm.xlu0 %422, %v420
      %v424 = vpop.permute.xlu0 %423
      %v426 = vmul.f32 %v418, %v424
      %v427 = vmul.f32 %v417, %v424
      %v428 = vmul.f32 %v416, %v424
      %v429 = vadd.f32 %v406, %v426
      %v430 = vadd.f32 %v407, %v427
      %v431 = vadd.f32 %v408, %v428
      %432 = vrot.lane.b32.xlu0 %v198, 48
      %v433 = vpop.permute.xlu0 %432
      %434 = vrot.lane.b32.xlu0 %v199, 48
      %v435 = vpop.permute.xlu0 %434
      %436 = vrot.lane.b32.xlu0 %v200, 48
      %v437 = vpop.permute.xlu0 %436
      %vm438 = vcmp.lt.s32.totalorder %v218, 48
      %v439 = vsel %vm438, %v435, %v437
      %v440 = vsel %vm438, %v433, %v435
      %v441 = vsel %vm438, %v437, %v433
      %s442 = scalar_lea.vmem %s0, 80
      %v443 = vld [vmem:[%s442] sm:$0xff]
      %445 = vset.pattern.permute.xlu0 0
      %446 = vperm.xlu0 %445, %v443
      %v447 = vpop.permute.xlu0 %446
      %v449 = vmul.f32 %v441, %v447
      %v450 = vmul.f32 %v440, %v447
      %v451 = vmul.f32 %v439, %v447
      %v452 = vadd.f32 %v429, %v449
      %v453 = vadd.f32 %v430, %v450
      %v454 = vadd.f32 %v431, %v451
      %455 = vrot.lane.b32.xlu0 %v198, 46
      %v456 = vpop.permute.xlu0 %455
      %457 = vrot.lane.b32.xlu0 %v199, 46
      %v458 = vpop.permute.xlu0 %457
      %459 = vrot.lane.b32.xlu0 %v200, 46
      %v460 = vpop.permute.xlu0 %459
      %vm461 = vcmp.lt.s32.totalorder %v218, 46
      %v462 = vsel %vm461, %v458, %v460
      %v463 = vsel %vm461, %v456, %v458
      %v464 = vsel %vm461, %v460, %v456
      %s465 = scalar_lea.vmem %s0, 88
      %v466 = vld [vmem:[%s465] sm:$0xff]
      %468 = vset.pattern.permute.xlu0 0
      %469 = vperm.xlu0 %468, %v466
      %v470 = vpop.permute.xlu0 %469
      %v472 = vmul.f32 %v464, %v470
      %v473 = vmul.f32 %v463, %v470
      %v474 = vmul.f32 %v462, %v470
      %v475 = vadd.f32 %v452, %v472
      %v476 = vadd.f32 %v453, %v473
      %v477 = vadd.f32 %v454, %v474
      %478 = vrot.lane.b32.xlu0 %v198, 2
      %v479 = vpop.permute.xlu0 %478
      %480 = vrot.lane.b32.xlu0 %v199, 2
      %v481 = vpop.permute.xlu0 %480
      %482 = vrot.lane.b32.xlu0 %v200, 2
      %v483 = vpop.permute.xlu0 %482
      %vm484 = vcmp.lt.s32.totalorder %v218, 2
      %v485 = vsel %vm484, %v481, %v483
      %v486 = vsel %vm484, %v479, %v481
      %v487 = vsel %vm484, %v483, %v479
      %s488 = scalar_lea.vmem %s0, 96
      %v489 = vld [vmem:[%s488] sm:$0xff]
      %491 = vset.pattern.permute.xlu0 0
      %492 = vperm.xlu0 %491, %v489
      %v493 = vpop.permute.xlu0 %492
      %v495 = vmul.f32 %v487, %v493
      %v496 = vmul.f32 %v486, %v493
      %v497 = vmul.f32 %v485, %v493
      %v498 = vadd.f32 %v475, %v495
      %v499 = vadd.f32 %v476, %v496
      %v500 = vadd.f32 %v477, %v497
      %501 = vrot.lane.b32.xlu0 %v198, 126
      %v502 = vpop.permute.xlu0 %501
      %503 = vrot.lane.b32.xlu0 %v199, 126
      %v504 = vpop.permute.xlu0 %503
      %505 = vrot.lane.b32.xlu0 %v200, 126
      %v506 = vpop.permute.xlu0 %505
      %vm507 = vcmp.lt.s32.totalorder %v218, 126
      %v508 = vsel %vm507, %v504, %v506
      %v509 = vsel %vm507, %v502, %v504
      %v510 = vsel %vm507, %v506, %v502
      %s511 = scalar_lea.vmem %s0, 112
      %v512 = vld [vmem:[%s511] sm:$0xff]
      %514 = vset.pattern.permute.xlu0 0
      %515 = vperm.xlu0 %514, %v512
      %v516 = vpop.permute.xlu0 %515
      %v518 = vmul.f32 %v509, %v516
      %v519 = vmul.f32 %v508, %v516
      %v520 = vmul.f32 %v510, %v516
      %v521 = vadd.f32 %v498, %v518
      %v522 = vadd.f32 %v499, %v519
      %v523 = vadd.f32 %v500, %v520
      %524 = vrot.lane.b32.xlu0 %v198, 82
      %v525 = vpop.permute.xlu0 %524
      %526 = vrot.lane.b32.xlu0 %v199, 82
      %v527 = vpop.permute.xlu0 %526
      %528 = vrot.lane.b32.xlu0 %v200, 82
      %v529 = vpop.permute.xlu0 %528
      %vm530 = vcmp.lt.s32.totalorder %v218, 82
      %v531 = vsel %vm530, %v527, %v529
      %v532 = vsel %vm530, %v525, %v527
      %v533 = vsel %vm530, %v529, %v525
      %s534 = scalar_lea.vmem %s0, 120
      %v535 = vld [vmem:[%s534] sm:$0xff]
      %537 = vset.pattern.permute.xlu0 0
      %538 = vperm.xlu0 %537, %v535
      %v539 = vpop.permute.xlu0 %538
      %v541 = vmul.f32 %v532, %v539
      %v542 = vmul.f32 %v531, %v539
      %v543 = vmul.f32 %v533, %v539
      %v544 = vadd.f32 %v521, %v541
      %v545 = vadd.f32 %v522, %v542
      %v546 = vadd.f32 %v523, %v543
      %547 = vrot.lane.b32.xlu0 %v198, 80
      %v548 = vpop.permute.xlu0 %547
      %549 = vrot.lane.b32.xlu0 %v199, 80
      %v550 = vpop.permute.xlu0 %549
      %551 = vrot.lane.b32.xlu0 %v200, 80
      %v552 = vpop.permute.xlu0 %551
      %vm553 = vcmp.lt.s32.totalorder %v218, 80
      %v554 = vsel %vm553, %v550, %v552
      %v555 = vsel %vm553, %v548, %v550
      %v556 = vsel %vm553, %v552, %v548
      %s557 = scalar_lea.vmem %s0, 128
      %v558 = vld [vmem:[%s557] sm:$0xff]
      %560 = vset.pattern.permute.xlu0 0
      %561 = vperm.xlu0 %560, %v558
      %v562 = vpop.permute.xlu0 %561
      %v564 = vmul.f32 %v555, %v562
      %v565 = vmul.f32 %v554, %v562
      %v566 = vmul.f32 %v556, %v562
      %v567 = vadd.f32 %v544, %v564
      %v568 = vadd.f32 %v545, %v565
      %v569 = vadd.f32 %v546, %v566
      %570 = vrot.lane.b32.xlu0 %v198, 78
      %v571 = vpop.permute.xlu0 %570
      %572 = vrot.lane.b32.xlu0 %v199, 78
      %v573 = vpop.permute.xlu0 %572
      %574 = vrot.lane.b32.xlu0 %v200, 78
      %v575 = vpop.permute.xlu0 %574
      %vm576 = vcmp.lt.s32.totalorder %v218, 78
      %v577 = vsel %vm576, %v573, %v575
      %v578 = vsel %vm576, %v571, %v573
      %v579 = vsel %vm576, %v575, %v571
      %s580 = scalar_lea.vmem %s0, 136
      %v581 = vld [vmem:[%s580] sm:$0xff]
      %583 = vset.pattern.permute.xlu0 0
      %584 = vperm.xlu0 %583, %v581
      %v585 = vpop.permute.xlu0 %584
      %v587 = vmul.f32 %v578, %v585
      %v588 = vmul.f32 %v577, %v585
      %v589 = vmul.f32 %v579, %v585
      %v590 = vadd.f32 %v567, %v587
      %v591 = vadd.f32 %v568, %v588
      %v592 = vadd.f32 %v569, %v589
      %593 = vst [vmem:[#allocation2 + $0x18] sm:$0xff] %v590
      %594 = vst [vmem:[#allocation2 + $0x20] sm:$0xff] %v591
      %595 = vst [vmem:[#allocation2 + $0x28] sm:$0xff] %v592
      %s596 = scalar_lea.vmem %s0, 176
      %v597 = vld [vmem:[%s596] sm:$0xff]
      %599 = vset.pattern.permute.xlu0 0
      %600 = vperm.xlu0 %599, %v597
      %v601 = vpop.permute.xlu0 %600
      %v603 = vmul.f32 %v198, %v601
      %v604 = vmul.f32 %v199, %v601
      %v605 = vmul.f32 %v200, %v601
      %606 = vrot.lane.b32.xlu0 %v198, 75
      %v607 = vpop.permute.xlu0 %606
      %608 = vrot.lane.b32.xlu0 %v199, 75
      %v609 = vpop.permute.xlu0 %608
      %610 = vrot.lane.b32.xlu0 %v200, 75
      %v611 = vpop.permute.xlu0 %610
      %vm612 = vcmp.lt.s32.totalorder %v218, 75
      %v613 = vsel %vm612, %v609, %v611
      %v614 = vsel %vm612, %v607, %v609
      %v615 = vsel %vm612, %v611, %v607
      %s616 = scalar_lea.vmem %s0, 144
      %v617 = vld [vmem:[%s616] sm:$0xff]
      %619 = vset.pattern.permute.xlu0 0
      %620 = vperm.xlu0 %619, %v617
      %v621 = vpop.permute.xlu0 %620
      %v623 = vmul.f32 %v615, %v621
      %v624 = vmul.f32 %v614, %v621
      %v625 = vmul.f32 %v613, %v621
      %v626 = vadd.f32 %v603, %v623
      %v627 = vadd.f32 %v604, %v624
      %v628 = vadd.f32 %v605, %v625
      %629 = vrot.lane.b32.xlu0 %v198, 72
      %v630 = vpop.permute.xlu0 %629
      %631 = vrot.lane.b32.xlu0 %v199, 72
      %v632 = vpop.permute.xlu0 %631
      %633 = vrot.lane.b32.xlu0 %v200, 72
      %v634 = vpop.permute.xlu0 %633
      %vm635 = vcmp.lt.s32.totalorder %v218, 72
      %v636 = vsel %vm635, %v632, %v634
      %v637 = vsel %vm635, %v630, %v632
      %v638 = vsel %vm635, %v634, %v630
      %s639 = scalar_lea.vmem %s0, 152
      %v640 = vld [vmem:[%s639] sm:$0xff]
      %642 = vset.pattern.permute.xlu0 0
      %643 = vperm.xlu0 %642, %v640
      %v644 = vpop.permute.xlu0 %643
      %v646 = vmul.f32 %v638, %v644
      %v647 = vmul.f32 %v637, %v644
      %v648 = vmul.f32 %v636, %v644
      %v649 = vadd.f32 %v626, %v646
      %v650 = vadd.f32 %v627, %v647
      %v651 = vadd.f32 %v628, %v648
      %652 = vrot.lane.b32.xlu0 %v198, 69
      %v653 = vpop.permute.xlu0 %652
      %654 = vrot.lane.b32.xlu0 %v199, 69
      %v655 = vpop.permute.xlu0 %654
      %656 = vrot.lane.b32.xlu0 %v200, 69
      %v657 = vpop.permute.xlu0 %656
      %vm658 = vcmp.lt.s32.totalorder %v218, 69
      %v659 = vsel %vm658, %v655, %v657
      %v660 = vsel %vm658, %v653, %v655
      %v661 = vsel %vm658, %v657, %v653
      %s662 = scalar_lea.vmem %s0, 160
      %v663 = vld [vmem:[%s662] sm:$0xff]
      %665 = vset.pattern.permute.xlu0 0
      %666 = vperm.xlu0 %665, %v663
      %v667 = vpop.permute.xlu0 %666
      %v669 = vmul.f32 %v661, %v667
      %v670 = vmul.f32 %v660, %v667
      %v671 = vmul.f32 %v659, %v667
      %v672 = vadd.f32 %v649, %v669
      %v673 = vadd.f32 %v650, %v670
      %v674 = vadd.f32 %v651, %v671
      %675 = vrot.lane.b32.xlu0 %v198, 3
      %v676 = vpop.permute.xlu0 %675
      %677 = vrot.lane.b32.xlu0 %v199, 3
      %v678 = vpop.permute.xlu0 %677
      %679 = vrot.lane.b32.xlu0 %v200, 3
      %v680 = vpop.permute.xlu0 %679
      %vm681 = vcmp.lt.s32.totalorder %v218, 3
      %v682 = vsel %vm681, %v678, %v680
      %v683 = vsel %vm681, %v676, %v678
      %v684 = vsel %vm681, %v680, %v676
      %s685 = scalar_lea.vmem %s0, 168
      %v686 = vld [vmem:[%s685] sm:$0xff]
      %688 = vset.pattern.permute.xlu0 0
      %689 = vperm.xlu0 %688, %v686
      %v690 = vpop.permute.xlu0 %689
      %v692 = vmul.f32 %v684, %v690
      %v693 = vmul.f32 %v683, %v690
      %v694 = vmul.f32 %v682, %v690
      %v695 = vadd.f32 %v672, %v692
      %v696 = vadd.f32 %v673, %v693
      %v697 = vadd.f32 %v674, %v694
      %698 = vrot.lane.b32.xlu0 %v198, 125
      %v699 = vpop.permute.xlu0 %698
      %700 = vrot.lane.b32.xlu0 %v199, 125
      %v701 = vpop.permute.xlu0 %700
      %702 = vrot.lane.b32.xlu0 %v200, 125
      %v703 = vpop.permute.xlu0 %702
      %vm704 = vcmp.lt.s32.totalorder %v218, 125
      %v705 = vsel %vm704, %v701, %v703
      %v706 = vsel %vm704, %v699, %v701
      %v707 = vsel %vm704, %v703, %v699
      %s708 = scalar_lea.vmem %s0, 184
      %v709 = vld [vmem:[%s708] sm:$0xff]
      %711 = vset.pattern.permute.xlu0 0
      %712 = vperm.xlu0 %711, %v709
      %v713 = vpop.permute.xlu0 %712
      %v715 = vmul.f32 %v706, %v713
      %v716 = vmul.f32 %v705, %v713
      %v717 = vmul.f32 %v707, %v713
      %v718 = vadd.f32 %v695, %v715
      %v719 = vadd.f32 %v696, %v716
      %v720 = vadd.f32 %v697, %v717
      %721 = vrot.lane.b32.xlu0 %v198, 59
      %v722 = vpop.permute.xlu0 %721
      %723 = vrot.lane.b32.xlu0 %v199, 59
      %v724 = vpop.permute.xlu0 %723
      %725 = vrot.lane.b32.xlu0 %v200, 59
      %v726 = vpop.permute.xlu0 %725
      %vm727 = vcmp.lt.s32.totalorder %v218, 59
      %v728 = vsel %vm727, %v724, %v726
      %v729 = vsel %vm727, %v722, %v724
      %v730 = vsel %vm727, %v726, %v722
      %s731 = scalar_lea.vmem %s0, 192
      %v732 = vld [vmem:[%s731] sm:$0xff]
      %734 = vset.pattern.permute.xlu0 0
      %735 = vperm.xlu0 %734, %v732
      %v736 = vpop.permute.xlu0 %735
      %v738 = vmul.f32 %v729, %v736
      %v739 = vmul.f32 %v728, %v736
      %v740 = vmul.f32 %v730, %v736
      %v741 = vadd.f32 %v718, %v738
      %v742 = vadd.f32 %v719, %v739
      %v743 = vadd.f32 %v720, %v740
      %744 = vrot.lane.b32.xlu0 %v198, 56
      %v745 = vpop.permute.xlu0 %744
      %746 = vrot.lane.b32.xlu0 %v199, 56
      %v747 = vpop.permute.xlu0 %746
      %748 = vrot.lane.b32.xlu0 %v200, 56
      %v749 = vpop.permute.xlu0 %748
      %vm750 = vcmp.lt.s32.totalorder %v218, 56
      %v751 = vsel %vm750, %v747, %v749
      %v752 = vsel %vm750, %v745, %v747
      %v753 = vsel %vm750, %v749, %v745
      %s754 = scalar_lea.vmem %s0, 200
      %v755 = vld [vmem:[%s754] sm:$0xff]
      %757 = vset.pattern.permute.xlu0 0
      %758 = vperm.xlu0 %757, %v755
      %v759 = vpop.permute.xlu0 %758
      %v761 = vmul.f32 %v752, %v759
      %v762 = vmul.f32 %v751, %v759
      %v763 = vmul.f32 %v753, %v759
      %v764 = vadd.f32 %v741, %v761
      %v765 = vadd.f32 %v742, %v762
      %v766 = vadd.f32 %v743, %v763
      %767 = vrot.lane.b32.xlu0 %v198, 53
      %v768 = vpop.permute.xlu0 %767
      %769 = vrot.lane.b32.xlu0 %v199, 53
      %v770 = vpop.permute.xlu0 %769
      %771 = vrot.lane.b32.xlu0 %v200, 53
      %v772 = vpop.permute.xlu0 %771
      %vm773 = vcmp.lt.s32.totalorder %v218, 53
      %v774 = vsel %vm773, %v770, %v772
      %v775 = vsel %vm773, %v768, %v770
      %v776 = vsel %vm773, %v772, %v768
      %s777 = scalar_lea.vmem %s0, 208
      %v778 = vld [vmem:[%s777] sm:$0xff]
      %780 = vset.pattern.permute.xlu0 0
      %781 = vperm.xlu0 %780, %v778
      %v782 = vpop.permute.xlu0 %781
      %v784 = vmul.f32 %v775, %v782
      %v785 = vmul.f32 %v774, %v782
      %v786 = vmul.f32 %v776, %v782
      %v787 = vadd.f32 %v764, %v784
      %v788 = vadd.f32 %v765, %v785
      %v789 = vadd.f32 %v766, %v786
      %790 = vst [vmem:[#allocation2 + $0x30] sm:$0xff] %v787
      %791 = vst [vmem:[#allocation2 + $0x38] sm:$0xff] %v788
      %792 = vst [vmem:[#allocation2 + $0x40] sm:$0xff] %v789
      %s793 = scalar_lea.vmem %s0, 248
      %v794 = vld [vmem:[%s793] sm:$0xff]
      %796 = vset.pattern.permute.xlu0 0
      %797 = vperm.xlu0 %796, %v794
      %v798 = vpop.permute.xlu0 %797
      %v800 = vmul.f32 %v198, %v798
      %v801 = vmul.f32 %v199, %v798
      %v802 = vmul.f32 %v200, %v798
      %803 = vrot.lane.b32.xlu0 %v198, 100
      %v804 = vpop.permute.xlu0 %803
      %805 = vrot.lane.b32.xlu0 %v199, 100
      %v806 = vpop.permute.xlu0 %805
      %807 = vrot.lane.b32.xlu0 %v200, 100
      %v808 = vpop.permute.xlu0 %807
      %vm809 = vcmp.lt.s32.totalorder %v218, 100
      %v810 = vsel %vm809, %v806, %v808
      %v811 = vsel %vm809, %v804, %v806
      %v812 = vsel %vm809, %v808, %v804
      %s813 = scalar_lea.vmem %s0, 216
      %v814 = vld [vmem:[%s813] sm:$0xff]
      %816 = vset.pattern.permute.xlu0 0
      %817 = vperm.xlu0 %816, %v814
      %v818 = vpop.permute.xlu0 %817
      %v820 = vmul.f32 %v812, %v818
      %v821 = vmul.f32 %v811, %v818
      %v822 = vmul.f32 %v810, %v818
      %v823 = vadd.f32 %v800, %v820
      %v824 = vadd.f32 %v801, %v821
      %v825 = vadd.f32 %v802, %v822
      %826 = vrot.lane.b32.xlu0 %v198, 96
      %v827 = vpop.permute.xlu0 %826
      %828 = vrot.lane.b32.xlu0 %v199, 96
      %v829 = vpop.permute.xlu0 %828
      %830 = vrot.lane.b32.xlu0 %v200, 96
      %v831 = vpop.permute.xlu0 %830
      %vm832 = vcmp.lt.s32.totalorder %v218, 96
      %v833 = vsel %vm832, %v829, %v831
      %v834 = vsel %vm832, %v827, %v829
      %v835 = vsel %vm832, %v831, %v827
      %s836 = scalar_lea.vmem %s0, 224
      %v837 = vld [vmem:[%s836] sm:$0xff]
      %839 = vset.pattern.permute.xlu0 0
      %840 = vperm.xlu0 %839, %v837
      %v841 = vpop.permute.xlu0 %840
      %v843 = vmul.f32 %v835, %v841
      %v844 = vmul.f32 %v834, %v841
      %v845 = vmul.f32 %v833, %v841
      %v846 = vadd.f32 %v823, %v843
      %v847 = vadd.f32 %v824, %v844
      %v848 = vadd.f32 %v825, %v845
      %849 = vrot.lane.b32.xlu0 %v198, 92
      %v850 = vpop.permute.xlu0 %849
      %851 = vrot.lane.b32.xlu0 %v199, 92
      %v852 = vpop.permute.xlu0 %851
      %853 = vrot.lane.b32.xlu0 %v200, 92
      %v854 = vpop.permute.xlu0 %853
      %vm855 = vcmp.lt.s32.totalorder %v218, 92
      %v856 = vsel %vm855, %v852, %v854
      %v857 = vsel %vm855, %v850, %v852
      %v858 = vsel %vm855, %v854, %v850
      %s859 = scalar_lea.vmem %s0, 232
      %v860 = vld [vmem:[%s859] sm:$0xff]
      %862 = vset.pattern.permute.xlu0 0
      %863 = vperm.xlu0 %862, %v860
      %v864 = vpop.permute.xlu0 %863
      %v866 = vmul.f32 %v858, %v864
      %v867 = vmul.f32 %v857, %v864
      %v868 = vmul.f32 %v856, %v864
      %v869 = vadd.f32 %v846, %v866
      %v870 = vadd.f32 %v847, %v867
      %v871 = vadd.f32 %v848, %v868
      %872 = vrot.lane.b32.xlu0 %v198, 4
      %v873 = vpop.permute.xlu0 %872
      %874 = vrot.lane.b32.xlu0 %v199, 4
      %v875 = vpop.permute.xlu0 %874
      %876 = vrot.lane.b32.xlu0 %v200, 4
      %v877 = vpop.permute.xlu0 %876
      %vm878 = vcmp.lt.s32.totalorder %v218, 4
      %v879 = vsel %vm878, %v875, %v877
      %v880 = vsel %vm878, %v873, %v875
      %v881 = vsel %vm878, %v877, %v873
      %s882 = scalar_lea.vmem %s0, 240
      %v883 = vld [vmem:[%s882] sm:$0xff]
      %885 = vset.pattern.permute.xlu0 0
      %886 = vperm.xlu0 %885, %v883
      %v887 = vpop.permute.xlu0 %886
      %v889 = vmul.f32 %v881, %v887
      %v890 = vmul.f32 %v880, %v887
      %v891 = vmul.f32 %v879, %v887
      %v892 = vadd.f32 %v869, %v889
      %v893 = vadd.f32 %v870, %v890
      %v894 = vadd.f32 %v871, %v891
      %895 = vrot.lane.b32.xlu0 %v198, 124
      %v896 = vpop.permute.xlu0 %895
      %897 = vrot.lane.b32.xlu0 %v199, 124
      %v898 = vpop.permute.xlu0 %897
      %899 = vrot.lane.b32.xlu0 %v200, 124
      %v900 = vpop.permute.xlu0 %899
      %vm901 = vcmp.lt.s32.totalorder %v218, 124
      %v902 = vsel %vm901, %v898, %v900
      %v903 = vsel %vm901, %v896, %v898
      %v904 = vsel %vm901, %v900, %v896
      %s905 = scalar_lea.vmem %s0, 256
      %v906 = vld [vmem:[%s905] sm:$0xff]
      %908 = vset.pattern.permute.xlu0 0
      %909 = vperm.xlu0 %908, %v906
      %v910 = vpop.permute.xlu0 %909
      %v912 = vmul.f32 %v903, %v910
      %v913 = vmul.f32 %v902, %v910
      %v914 = vmul.f32 %v904, %v910
      %v915 = vadd.f32 %v892, %v912
      %v916 = vadd.f32 %v893, %v913
      %v917 = vadd.f32 %v894, %v914
      %918 = vrot.lane.b32.xlu0 %v198, 36
      %v919 = vpop.permute.xlu0 %918
      %920 = vrot.lane.b32.xlu0 %v199, 36
      %v921 = vpop.permute.xlu0 %920
      %922 = vrot.lane.b32.xlu0 %v200, 36
      %v923 = vpop.permute.xlu0 %922
      %vm924 = vcmp.lt.s32.totalorder %v218, 36
      %v925 = vsel %vm924, %v921, %v923
      %v926 = vsel %vm924, %v919, %v921
      %v927 = vsel %vm924, %v923, %v919
      %s928 = scalar_lea.vmem %s0, 264
      %v929 = vld [vmem:[%s928] sm:$0xff]
      %931 = vset.pattern.permute.xlu0 0
      %932 = vperm.xlu0 %931, %v929
      %v933 = vpop.permute.xlu0 %932
      %v935 = vmul.f32 %v926, %v933
      %v936 = vmul.f32 %v925, %v933
      %v937 = vmul.f32 %v927, %v933
      %v938 = vadd.f32 %v915, %v935
      %v939 = vadd.f32 %v916, %v936
      %v940 = vadd.f32 %v917, %v937
      %941 = vrot.lane.b32.xlu0 %v198, 32
      %v942 = vpop.permute.xlu0 %941
      %943 = vrot.lane.b32.xlu0 %v199, 32
      %v944 = vpop.permute.xlu0 %943
      %945 = vrot.lane.b32.xlu0 %v200, 32
      %v946 = vpop.permute.xlu0 %945
      %vm947 = vcmp.lt.s32.totalorder %v218, 32
      %v948 = vsel %vm947, %v944, %v946
      %v949 = vsel %vm947, %v942, %v944
      %v950 = vsel %vm947, %v946, %v942
      %s951 = scalar_lea.vmem %s0, 272
      %v952 = vld [vmem:[%s951] sm:$0xff]
      %954 = vset.pattern.permute.xlu0 0
      %955 = vperm.xlu0 %954, %v952
      %v956 = vpop.permute.xlu0 %955
      %v958 = vmul.f32 %v949, %v956
      %v959 = vmul.f32 %v948, %v956
      %v960 = vmul.f32 %v950, %v956
      %v961 = vadd.f32 %v938, %v958
      %v962 = vadd.f32 %v939, %v959
      %v963 = vadd.f32 %v940, %v960
      %964 = vrot.lane.b32.xlu0 %v198, 28
      %v965 = vpop.permute.xlu0 %964
      %966 = vrot.lane.b32.xlu0 %v199, 28
      %v967 = vpop.permute.xlu0 %966
      %968 = vrot.lane.b32.xlu0 %v200, 28
      %v969 = vpop.permute.xlu0 %968
      %vm970 = vcmp.lt.s32.totalorder %v218, 28
      %v971 = vsel %vm970, %v967, %v969
      %v972 = vsel %vm970, %v965, %v967
      %v973 = vsel %vm970, %v969, %v965
      %s974 = scalar_lea.vmem %s0, 280
      %v975 = vld [vmem:[%s974] sm:$0xff]
      %977 = vset.pattern.permute.xlu0 0
      %978 = vperm.xlu0 %977, %v975
      %v979 = vpop.permute.xlu0 %978
      %v981 = vmul.f32 %v972, %v979
      %v982 = vmul.f32 %v971, %v979
      %v983 = vmul.f32 %v973, %v979
      %v984 = vadd.f32 %v961, %v981
      %v985 = vadd.f32 %v962, %v982
      %v986 = vadd.f32 %v963, %v983
      %987 = vst [vmem:[#allocation2 + $0x48] sm:$0xff] %v984
      %988 = vst [vmem:[#allocation2 + $0x50] sm:$0xff] %v985
      %989 = vst [vmem:[#allocation2 + $0x58] sm:$0xff] %v986
      %v990 = vld [vmem:[%s1] sm:$0xff]
      %v991 = vld [vmem:[#allocation2] sm:$0xff]
      %v992 = vld [vmem:[#allocation2 + $0x8] sm:$0xff]
      %v993 = vld [vmem:[#allocation2 + $0x10] sm:$0xff]
      %v994 = vld [vmem:[#allocation2 + $0x18] sm:$0xff]
      %v995 = vld [vmem:[#allocation2 + $0x20] sm:$0xff]
      %v996 = vld [vmem:[#allocation2 + $0x28] sm:$0xff]
      %v997 = vld [vmem:[#allocation2 + $0x30] sm:$0xff]
      %v998 = vld [vmem:[#allocation2 + $0x38] sm:$0xff]
      %v999 = vld [vmem:[#allocation2 + $0x40] sm:$0xff]
      %v1000 = vld [vmem:[#allocation2 + $0x48] sm:$0xff]
      %v1001 = vld [vmem:[#allocation2 + $0x50] sm:$0xff]
      %v1002 = vld [vmem:[#allocation2 + $0x58] sm:$0xff]
      %v1003 = vld [vmem:[%s2] sm:$0xff]
      %1005 = vset.pattern.permute.xlu0 0
      %1006 = vperm.xlu0 %1005, %v1003
      %v1007 = vpop.permute.xlu0 %1006
      %vm1009 = vcmask 261120
      %v1011 = vsel %vm1009, %v990, 0
      %1013 = vmatprep.subr.mxu0 %v992
      %1014 = vmatpush1.msra.mxu0 %v991
      %1015 = vmatprep.subr.mxu0 %v995
      %1016 = vmatpush1.msra.mxu0 %v994
      %1017 = vmatprep.subr.mxu0 %v998
      %1018 = vmatpush1.msra.mxu0 %v997
      %1019 = vmatprep.subr.mxu0 %v1001
      %1020 = vmatpush1.msra.mxu0 %v1000
      %1021 = vmatprep.subr.mxu0 0.0
      %1022 = vmatpush1.msra.mxu0 0.0
      %1023 = vmatprep.subr.mxu0 0.0
      %1024 = vmatpush1.msra.mxu0 0.0
      %1025 = vmatprep.subr.mxu0 0.0
      %1026 = vmatpush1.msra.mxu0 0.0
      %1027 = vmatprep.subr.mxu0 0.0
      %1028 = vmatpush1.msra.mxu0 0.0
      %1029 = vmatprep.subr.mxu0 0.0
      %1030 = vmatpush1.msra.mxu0 0.0
      %1031 = vmatprep.subr.mxu0 0.0
      %1032 = vmatpush1.msra.mxu0 0.0
      %1033 = vmatprep.subr.mxu0 0.0
      %1034 = vmatpush1.msra.mxu0 0.0
      %1035 = vmatprep.subr.mxu0 0.0
      %1036 = vmatpush1.msra.mxu0 0.0
      %1037 = vmatprep.subr.mxu0 0.0
      %1038 = vmatpush1.msra.mxu0 0.0
      %1039 = vmatprep.subr.mxu0 0.0
      %1040 = vmatpush1.msra.mxu0 0.0
      %1041 = vmatprep.subr.mxu0 0.0
      %1042 = vmatpush1.msra.mxu0 0.0
      %1043 = vmatprep.subr.mxu0 0.0
      %1044 = vmatpush1.msra.mxu0 0.0
      %1045 = vmatprep.subr.mxu0 0.0
      %1046 = vmatpush1.msra.mxu0 0.0
      %1047 = vmatprep.subr.mxu0 0.0
      %1048 = vmatpush1.msra.mxu0 0.0
      %1049 = vmatprep.subr.mxu0 0.0
      %1050 = vmatpush1.msra.mxu0 0.0
      %1051 = vmatprep.subr.mxu0 0.0
      %1052 = vmatpush1.msra.mxu0 0.0
      %1053 = vmatprep.subr.mxu0 0.0
      %1054 = vmatpush1.msra.mxu0 0.0
      %1055 = vmatprep.subr.mxu0 0.0
      %1056 = vmatpush1.msra.mxu0 0.0
      %1057 = vmatprep.subr.mxu0 0.0
      %1058 = vmatpush1.msra.mxu0 0.0
      %1059 = vmatprep.subr.mxu0 0.0
      %1060 = vmatpush1.msra.mxu0 0.0
      %1061 = vmatprep.subr.mxu0 0.0
      %1062 = vmatpush1.msra.mxu0 0.0
      %1063 = vmatprep.subr.mxu0 0.0
      %1064 = vmatpush1.msra.mxu0 0.0
      %1065 = vmatprep.subr.mxu0 0.0
      %1066 = vmatpush1.msra.mxu0 0.0
      %1067 = vmatprep.subr.mxu0 0.0
      %1068 = vmatpush1.msra.mxu0 0.0
      %1069 = vmatprep.subr.mxu0 0.0
      %1070 = vmatpush1.msra.mxu0 0.0
      %1071 = vmatprep.subr.mxu0 0.0
      %1072 = vmatpush1.msra.mxu0 0.0
      %1073 = vmatprep.subr.mxu0 0.0
      %1074 = vmatpush1.msra.mxu0 0.0
      %1075 = vmatprep.subr.mxu0 0.0
      %1076 = vmatpush1.msra.mxu0 0.0
      %1077 = vmatprep.mubr.f32.mxu0 0.0
      %1078 = vmatmul.mubr.f32.gmra.mrb[0].mxu0 %v1011
      %v1079 = vpop.f32.mrb[0].mxu0
      %v1080 = vadd.f32 %v1007, %v1079
      %v1081 = vpop.f32.mrb[0].mxu0
      %v1082 = vadd.f32 %v1007, %v1081
      %1083 = vdwg.mxu0
      %1084 = vmatprep.subr.mxu0 0.0
      %1085 = vmatpush1.msra.mxu0 %v993
      %1086 = vmatprep.subr.mxu0 0.0
      %1087 = vmatpush1.msra.mxu0 %v996
      %1088 = vmatprep.subr.mxu0 0.0
      %1089 = vmatpush1.msra.mxu0 %v999
      %1090 = vmatprep.subr.mxu0 0.0
      %1091 = vmatpush1.msra.mxu0 %v1002
      %1092 = vmatprep.subr.mxu0 0.0
      %1093 = vmatpush1.msra.mxu0 0.0
      %1094 = vmatprep.subr.mxu0 0.0
      %1095 = vmatpush1.msra.mxu0 0.0
      %1096 = vmatprep.subr.mxu0 0.0
      %1097 = vmatpush1.msra.mxu0 0.0
      %1098 = vmatprep.subr.mxu0 0.0
      %1099 = vmatpush1.msra.mxu0 0.0
      %1100 = vmatprep.subr.mxu0 0.0
      %1101 = vmatpush1.msra.mxu0 0.0
      %1102 = vmatprep.subr.mxu0 0.0
      %1103 = vmatpush1.msra.mxu0 0.0
      %1104 = vmatprep.subr.mxu0 0.0
      %1105 = vmatpush1.msra.mxu0 0.0
      %1106 = vmatprep.subr.mxu0 0.0
      %1107 = vmatpush1.msra.mxu0 0.0
      %1108 = vmatprep.subr.mxu0 0.0
      %1109 = vmatpush1.msra.mxu0 0.0
      %1110 = vmatprep.subr.mxu0 0.0
      %1111 = vmatpush1.msra.mxu0 0.0
      %1112 = vmatprep.subr.mxu0 0.0
      %1113 = vmatpush1.msra.mxu0 0.0
      %1114 = vmatprep.subr.mxu0 0.0
      %1115 = vmatpush1.msra.mxu0 0.0
      %1116 = vmatprep.subr.mxu0 0.0
      %1117 = vmatpush1.msra.mxu0 0.0
      %1118 = vmatprep.subr.mxu0 0.0
      %1119 = vmatpush1.msra.mxu0 0.0
      %1120 = vmatprep.subr.mxu0 0.0
      %1121 = vmatpush1.msra.mxu0 0.0
      %1122 = vmatprep.subr.mxu0 0.0
      %1123 = vmatpush1.msra.mxu0 0.0
      %1124 = vmatprep.subr.mxu0 0.0
      %1125 = vmatpush1.msra.mxu0 0.0
      %1126 = vmatprep.subr.mxu0 0.0
      %1127 = vmatpush1.msra.mxu0 0.0
      %1128 = vmatprep.subr.mxu0 0.0
      %1129 = vmatpush1.msra.mxu0 0.0
      %1130 = vmatprep.subr.mxu0 0.0
      %1131 = vmatpush1.msra.mxu0 0.0
      %1132 = vmatprep.subr.mxu0 0.0
      %1133 = vmatpush1.msra.mxu0 0.0
      %1134 = vmatprep.subr.mxu0 0.0
      %1135 = vmatpush1.msra.mxu0 0.0
      %1136 = vmatprep.subr.mxu0 0.0
      %1137 = vmatpush1.msra.mxu0 0.0
      %1138 = vmatprep.subr.mxu0 0.0
      %1139 = vmatpush1.msra.mxu0 0.0
      %1140 = vmatprep.subr.mxu0 0.0
      %1141 = vmatpush1.msra.mxu0 0.0
      %1142 = vmatprep.subr.mxu0 0.0
      %1143 = vmatpush1.msra.mxu0 0.0
      %1144 = vmatprep.subr.mxu0 0.0
      %1145 = vmatpush1.msra.mxu0 0.0
      %1146 = vmatprep.subr.mxu0 0.0
      %1147 = vmatpush1.msra.mxu0 0.0
      %1148 = vmatprep.mubr.f32.mxu0 0.0
      %1149 = vmatmul.mubr.f32.gmra.mrb[0].mxu0 %v1011
      %v1150 = vpop.f32.mrb[0].mxu0
      %v1151 = vadd.f32 %v1007, %v1150
      %v1152 = vpop.f32.mrb[0].mxu0
      %1153 = vdwg.mxu0
      %1154 = vst [vmem:[%s197] sm:$0xff] %v1080
      %1155 = vst [vmem:[%s197 + $0x8] sm:$0xff] %v1082
      %1156 = vst [vmem:[%s197 + $0x10] sm:$0xff] %v1151
      %p1157 = scmp.lt.s32.totalorder %s15, 1
      %s1158 = scalar_select %p1157, %s15, 1
      %s1159 = smul.addr %s1158, 3
      %s1160 = smul.addr %s1159, 8
      %s1161 = scalar_lea.vmem %s4, %s1160
      // Predicated region
      $region37: #{split_spatial_conv.1} parent=35 // pred_check
        %p1162 = pneg %p122
      $region38: #{split_spatial_conv.1} parent=35 // pred_check_branch
        %1164 = sbr.rel (%p1162) target = $region40
      $region39: #{split_spatial_conv.1} parent=35 // pred_region
        _
      $region40: #{split_spatial_conv.1} parent=35 // pred_fallthru
        _
    $region36: #{split_spatial_conv.1} parent=5 // pred_fallthru
      _
    %p1165 = scmp.le.s32.totalorder 2, %s10
    // Predicated region
    $region41: #{split_spatial_conv.1} parent=5 // pred_check
      %p1166 = pneg %p1165
    $region42: #{split_spatial_conv.1} parent=5 // pred_check_branch
      %1168 = sbr.rel (%p1166) target = $region44
    $region43: #{split_spatial_conv.1} parent=5 // pred_region
      %s1169 = ssub.s32 %s10, 2
      // Predicated region
      $region45: #{split_spatial_conv.1} parent=43 // pred_check
        %p1170 = pneg %p128
      $region46: #{split_spatial_conv.1} parent=43 // pred_check_branch
        %1172 = sbr.rel (%p1170) target = $region48
      $region47: #{split_spatial_conv.1} parent=43 // pred_region
        %p1173 = scmp.lt.s32.totalorder %s16, 1
        %s1174 = scalar_select %p1173, %s16, 1
        %s1175 = smul.addr %s1174, 3
        %s1176 = smul.addr %s1175, 8
        %s1177 = scalar_lea.vmem %s4, %s1176
      $region48: #{split_spatial_conv.1} parent=43 // pred_fallthru
        _
    $region44: #{split_spatial_conv.1} parent=5 // pred_fallthru
      _
  $region6: #{split_spatial_conv.1} parent=0 // loop_footer
    %s14 = sadd.s32 1, %s10
  $region7: #{split_spatial_conv.1} parent=0 // loop_footer_branch
    %9 = sbr.rel target = $region3
  $region8: #{split_spatial_conv.1} parent=0 // loop_exit
    _

</llo_original>
